<compile_context>
chip_gen: v7x
topology: tpu7x:2x2x1
jax: 0.10.0
libtpu: 0.0.40
codegen_flags: <defaults>
</compile_context>

<pallas_src>
import math

import jax
import jax.numpy as jnp
from jax import lax
from jax.experimental import pallas as pl
from jax.experimental.pallas import tpu as pltpu


# ------------------------------------------------------------------ helpers
def _round_up(x, m):
    return ((x + m - 1) // m) * m


def _pad_axis(a, axis, new_size):
    pad = new_size - a.shape[axis]
    if pad == 0:
        return a
    widths = [(0, 0)] * a.ndim
    widths[axis] = (0, pad)
    return jnp.pad(a, widths)


def _split_heads(t, num_heads):
    # [L, N, E] -> [N*num_heads, L, dh]  (same layout as torch.nn.MultiheadAttention)
    L, N, E = t.shape
    dh = E // num_heads
    return t.reshape(L, N, num_heads, dh).transpose(1, 2, 0, 3).reshape(N * num_heads, L, dh)


def _merge_heads(t, num_heads):
    # [N*num_heads, L, dh] -> [L, N, E]
    BH, L, dh = t.shape
    N = BH // num_heads
    return t.reshape(N, num_heads, L, dh).transpose(2, 0, 1, 3).reshape(L, N, num_heads * dh)


# ------------------------------------------ kernel 1: pos-add + q/k/v projections + MHA in_proj
def _embed_qkv_kernel(x_ref, pos_ref,
                      wq_ref, bq_ref, wk_ref, bk_ref, wv_ref, bv_ref,
                      wqi_ref, bqi_ref, wki_ref, bki_ref, wvi_ref, bvi_ref,
                      q_ref, k_ref, v_ref):
    # x_ref: (1, ts, D)  pos_ref: (ts, D)  w*: (D,E)/(E,E)  b*: (1,E)  outputs: (1, ts, E)
    h = x_ref[0] + pos_ref[...]

    def two_proj(w1, b1, w2, b2):
        # native-dtype operands straight into the MXU, f32 accumulation; bias fused in epilogue
        t = jnp.dot(h, w1[...], preferred_element_type=jnp.float32) + b1[...]
        t = jnp.dot(t, w2[...], preferred_element_type=jnp.float32) + b2[...]
        return t

    q_ref[0] = two_proj(wq_ref, bq_ref, wqi_ref, bqi_ref).astype(q_ref.dtype)
    k_ref[0] = two_proj(wk_ref, bk_ref, wki_ref, bki_ref).astype(k_ref.dtype)
    v_ref[0] = two_proj(wv_ref, bv_ref, wvi_ref, bvi_ref).astype(v_ref.dtype)


def embed_and_qkv(x, pos_table, p, *, ts=256):
    """h = x + pos; q/k/v = mha_in_proj(outer_proj(h)).  x: [B,S,D] -> 3 x [B,S,E]."""
    B, S, D = x.shape
    E = p["wq"].shape[1]
    ts_eff = min(ts, _round_up(S, 8))
    S_pad = _round_up(S, ts_eff)
    x_p = _pad_axis(x, 1, S_pad)
    pos_p = _pad_axis(pos_table, 0, S_pad)

    def b2d(b):
        return b.reshape(1, -1)

    args = [x_p, pos_p,
            p["wq"], b2d(p["bq"]), p["wk"], b2d(p["bk"]), p["wv"], b2d(p["bv"]),
            p["wqi"], b2d(p["bqi"]), p["wki"], b2d(p["bki"]), p["wvi"], b2d(p["bvi"])]

    full = lambda shape: pl.BlockSpec(shape, lambda b, j: (0, 0))
    in_specs = [
        pl.BlockSpec((1, ts_eff, D), lambda b, j: (b, j, 0)),   # x row tile
        pl.BlockSpec((ts_eff, D), lambda b, j: (j, 0)),         # positional rows
    ] + [full(a.shape) for a in args[2:]]

    out_spec = pl.BlockSpec((1, ts_eff, E), lambda b, j: (b, j, 0))
    out_shape = jax.ShapeDtypeStruct((B, S_pad, E), x.dtype)

    flops = int(2 * B * S_pad * (3 * D * E + 3 * E * E))
    bytes_accessed = int(sum(a.size * a.dtype.itemsize for a in args)
                         + 3 * B * S_pad * E * x.dtype.itemsize)

    q2, k2, v2 = pl.pallas_call(
        _embed_qkv_kernel,
        out_shape=(out_shape, out_shape, out_shape),
        grid_spec=pltpu.PrefetchScalarGridSpec(
            num_scalar_prefetch=0,
            grid=(B, S_pad // ts_eff),
            in_specs=in_specs,
            out_specs=[out_spec, out_spec, out_spec],
        ),
        compiler_params=pltpu.CompilerParams(
            dimension_semantics=("parallel", "parallel")),
        cost_estimate=pl.CostEstimate(flops=flops, transcendentals=0,
                                      bytes_accessed=bytes_accessed),
    )(*args)
    return q2[:, :S], k2[:, :S], v2[:, :S]


# ------------------------------------------ kernel 2: per-(batch,head) softmax attention
def _make_attn_kernel(scale):
    def kernel(q_ref, k_ref, v_ref, o_ref):
        # q/k/v: (tb, L, dh). L and dh are tiny here -> VPU broadcast-multiply + reduce
        # (an MXU dot_general would be almost entirely masked at these sizes).
        q = q_ref[...] * scale                       # PyTorch scales q before QK^T
        k = k_ref[...]
        v = v_ref[...]
        s = (q[:, :, None, :] * k[:, None, :, :]).sum(axis=-1)    # (tb, L, L)
        s = s - s.max(axis=-1, keepdims=True)
        e = jnp.exp(s)
        w = e / e.sum(axis=-1, keepdims=True)                      # softmax
        o = (w[:, :, :, None] * v[:, None, :, :]).sum(axis=2)      # (tb, L, dh)
        o_ref[...] = o.astype(o_ref.dtype)
    return kernel


def mha_core(qh, kh, vh, *, scale, tb=256):
    """qh/kh/vh: [BH, L, dh]; softmax attention over L, independently per batch-head row."""
    BH, L, dh = qh.shape
    tb_eff = min(tb, BH)
    BH_pad = _round_up(BH, tb_eff)
    qh_p = _pad_axis(qh, 0, BH_pad)
    kh_p = _pad_axis(kh, 0, BH_pad)
    vh_p = _pad_axis(vh, 0, BH_pad)

    spec = pl.BlockSpec((tb_eff, L, dh), lambda i: (i, 0, 0))
    out = pl.pallas_call(
        _make_attn_kernel(scale),
        out_shape=jax.ShapeDtypeStruct((BH_pad, L, dh), qh.dtype),
        grid_spec=pltpu.PrefetchScalarGridSpec(
            num_scalar_prefetch=0,
            grid=(BH_pad // tb_eff,),
            in_specs=[spec, spec, spec],
            out_specs=spec,
        ),
        compiler_params=pltpu.CompilerParams(dimension_semantics=("parallel",)),
        cost_estimate=pl.CostEstimate(
            flops=int(4 * BH_pad * L * L * dh),
            transcendentals=int(BH_pad * L * L),
            bytes_accessed=int(4 * BH_pad * L * dh * qh.dtype.itemsize)),
    )(qh_p, kh_p, vh_p)
    return out[:BH]


# ------------------------------------------ kernel 3: fused linear chain (x @ W + b [, relu]) ...
def _make_chain_kernel(relu_flags):
    n = len(relu_flags)

    def kernel(*refs):
        x_ref, o_ref = refs[0], refs[-1]
        h = x_ref[...]
        for li in range(n):
            w_ref = refs[1 + 2 * li]
            b_ref = refs[2 + 2 * li]
            # native-dtype operands into the MXU, f32 accumulation; bias fused in the epilogue
            h = jnp.dot(h, w_ref[...], preferred_element_type=jnp.float32) + b_ref[...]
            if relu_flags[li]:
                h = jnp.maximum(h, 0.0)
        o_ref[...] = h.astype(o_ref.dtype)

    return kernel


def linear_chain(x2d, layers, relu_flags, *, tm=256, out_dtype=None):
    """y = chain over `layers` of (x @ W + b [, relu]); layers = [(W [K,N], b [N]), ...]."""
    assert len(layers) == len(relu_flags)
    M, K0 = x2d.shape
    out_dtype = out_dtype or x2d.dtype
    N_last = layers[-1][0].shape[1]

    # Lane-dense output: pad the final feature dim to a multiple of 128 so stores are
    # unmasked full-lane vst's (zero-padded weight columns / bias entries, sliced off after).
    N_pad = _round_up(N_last, 128)
    w_last, b_last = layers[-1]
    layers = list(layers[:-1]) + [(_pad_axis(w_last, 1, N_pad), _pad_axis(b_last, 0, N_pad))]

    # Large row tiles; pad the row count so the grid divides evenly (no divisibility assert).
    tm_eff = min(tm, _round_up(M, 8))
    M_pad = _round_up(M, tm_eff)
    x_p = _pad_axis(x2d, 0, M_pad)

    args = [x_p]
    in_specs = [pl.BlockSpec((tm_eff, K0), lambda i: (i, 0))]
    flops = 0
    bytes_accessed = x_p.size * x_p.dtype.itemsize
    for w, b in layers:
        kin, nout = w.shape
        b2 = b.reshape(1, nout)
        args += [w, b2]
        in_specs += [pl.BlockSpec((kin, nout), lambda i: (0, 0)),
                     pl.BlockSpec((1, nout), lambda i: (0, 0))]
        flops += 2 * M_pad * kin * nout
        bytes_accessed += w.size * w.dtype.itemsize + b2.size * b2.dtype.itemsize
    bytes_accessed += M_pad * N_pad * jnp.dtype(out_dtype).itemsize

    out = pl.pallas_call(
        _make_chain_kernel(tuple(relu_flags)),
        out_shape=jax.ShapeDtypeStruct((M_pad, N_pad), out_dtype),
        grid_spec=pltpu.PrefetchScalarGridSpec(
            num_scalar_prefetch=0,
            grid=(M_pad // tm_eff,),
            in_specs=in_specs,
            out_specs=pl.BlockSpec((tm_eff, N_pad), lambda i: (i, 0)),
        ),
        compiler_params=pltpu.CompilerParams(dimension_semantics=("parallel",)),
        cost_estimate=pl.CostEstimate(flops=int(flops), transcendentals=0,
                                      bytes_accessed=int(bytes_accessed)),
    )(*args)
    return out[:M, :N_last]


# ------------------------------------------ full forward
def classifier_attn_forward(x, p, *, num_heads, activ=True):
    """Pallas forward for ClassifierAttn (eval mode)."""
    B, S, D = x.shape
    E = p["wq"].shape[1]
    dh = E // num_heads

    # 1) positional-embedding add + proj_q/k/v + MHA in_proj (one fused kernel)
    q2, k2, v2 = embed_and_qkv(x, p["pos"][:S], p)

    # 2) multi-head attention.  NOTE: nn.MultiheadAttention defaults to batch_first=False,
    #    so it treats dim 0 of the [B, S, E] tensors as the attention axis — replicated here.
    qh = _split_heads(q2, num_heads)
    kh = _split_heads(k2, num_heads)
    vh = _split_heads(v2, num_heads)
    ah = mha_core(qh, kh, vh, scale=1.0 / math.sqrt(dh))
    a = _merge_heads(ah, num_heads)                           # [B, S, E]

    # TODO(synk): F.dropout(h, training=False) is an identity; training-mode dropout not implemented.

    # 3) MHA out_proj + lin0 (+ReLU) fused into one row-tiled kernel
    h = linear_chain(a.reshape(B * S, E),
                     [(p["wo"], p["bo"]), (p["w0"], p["b0"])],
                     relu_flags=(False, activ))
    H0 = p["w0"].shape[1]

    # 4) nn.Flatten + final linear (+ReLU)
    h = h.reshape(B, S * H0)
    out = linear_chain(h, [(p["w1"], p["b1"])], relu_flags=(activ,))
    return out


# ------------------------------------------ pure-JAX reference (mirrors the PyTorch module)
def _reference(x, p, *, num_heads, activ=True):
    hp = lax.Precision.HIGHEST
    B, S, D = x.shape
    E = p["wq"].shape[1]
    dh = E // num_heads

    def lin(t, w, b):
        return jnp.einsum("...k,kn->...n", t, w, precision=hp) + b

    h = x + p["pos"][None, :S, :]
    q = lin(h, p["wq"], p["bq"])
    k = lin(h, p["wk"], p["bk"])
    v = lin(h, p["wv"], p["bv"])

    qh = _split_heads(lin(q, p["wqi"], p["bqi"]), num_heads) * (1.0 / math.sqrt(dh))
    kh = _split_heads(lin(k, p["wki"], p["bki"]), num_heads)
    vh = _split_heads(lin(v, p["wvi"], p["bvi"]), num_heads)

    s = jnp.einsum("bld,bmd->blm", qh, kh, precision=hp)
    w = jax.nn.softmax(s, axis=-1)
    a = jnp.einsum("blm,bmd->bld", w, vh, precision=hp)
    a = _merge_heads(a, num_heads)
    a = lin(a, p["wo"], p["bo"])

    h1 = lin(a, p["w0"], p["b0"])
    if activ:
        h1 = jnp.maximum(h1, 0.0)
    h1 = h1.reshape(B, -1)
    h2 = lin(h1, p["w1"], p["b1"])
    if activ:
        h2 = jnp.maximum(h2, 0.0)
    return h2


if __name__ == "__main__":
    # cfg: seq_len=8, input=32, atten_hidden=32, num_head=4, num_linear=2,
    #      linear_io=[[32, 32], [8*32, _]], output=16, activ=True, dropout=False
    B, S, D, E, NH, H0, OUT = 2, 8, 32, 32, 4, 32, 16

    key = jax.random.PRNGKey(0)
    ks = jax.random.split(key, 18)

    def uinit(k, shape, fan_in):
        lim = 1.0 / math.sqrt(fan_in)
        return jax.random.uniform(k, shape, jnp.float32, -lim, lim)

    x = jax.random.normal(ks[0], (B, S, D), jnp.float32)

    params = dict(
        pos=jax.random.normal(ks[1], (S, D), jnp.float32),          # nn.Embedding weight
        # proj_q / proj_k / proj_v  (weights stored transposed: [in, out])
        wq=uinit(ks[2], (D, E), D), bq=uinit(ks[3], (E,), D),
        wk=uinit(ks[4], (D, E), D), bk=uinit(ks[5], (E,), D),
        wv=uinit(ks[6], (D, E), D), bv=uinit(ks[7], (E,), D),
        # nn.MultiheadAttention in_proj (split per q/k/v) and out_proj
        wqi=uinit(ks[8], (E, E), E), bqi=uinit(ks[9], (E,), E),
        wki=uinit(ks[10], (E, E), E), bki=uinit(ks[11], (E,), E),
        wvi=uinit(ks[12], (E, E), E), bvi=uinit(ks[13], (E,), E),
        wo=uinit(ks[14], (E, E), E), bo=jnp.zeros((E,), jnp.float32),
        # lin0 / lin1
        w0=uinit(ks[15], (E, H0), E), b0=uinit(ks[16], (H0,), E),
        w1=uinit(ks[17], (S * H0, OUT), S * H0),
        b1=jnp.zeros((OUT,), jnp.float32),
    )

    out = classifier_attn_forward(x, params, num_heads=NH, activ=True)
    out = jax.block_until_ready(out)

    ref = _reference(x, params, num_heads=NH, activ=True)
    assert out.shape == (B, OUT), out.shape
    assert jnp.allclose(out, ref, atol=1e-3, rtol=1e-3), float(jnp.max(jnp.abs(out - ref)))

    print("KERNEL_OK")
</pallas_src>

<mosaic_0001>
module attributes {stable_mosaic.version = 11 : i64} {
  func.func @_embed_qkv_kernel(%arg0: i32, %arg1: i32, %arg2: memref<1x8x32xf32, #tpu.memory_space<vmem>>, %arg3: memref<8x32xf32, #tpu.memory_space<vmem>>, %arg4: memref<32x32xf32, #tpu.memory_space<vmem>>, %arg5: memref<1x32xf32, #tpu.memory_space<vmem>>, %arg6: memref<32x32xf32, #tpu.memory_space<vmem>>, %arg7: memref<1x32xf32, #tpu.memory_space<vmem>>, %arg8: memref<32x32xf32, #tpu.memory_space<vmem>>, %arg9: memref<1x32xf32, #tpu.memory_space<vmem>>, %arg10: memref<32x32xf32, #tpu.memory_space<vmem>>, %arg11: memref<1x32xf32, #tpu.memory_space<vmem>>, %arg12: memref<32x32xf32, #tpu.memory_space<vmem>>, %arg13: memref<1x32xf32, #tpu.memory_space<vmem>>, %arg14: memref<32x32xf32, #tpu.memory_space<vmem>>, %arg15: memref<1x32xf32, #tpu.memory_space<vmem>>, %arg16: memref<1x8x32xf32, #tpu.memory_space<vmem>>, %arg17: memref<1x8x32xf32, #tpu.memory_space<vmem>>, %arg18: memref<1x8x32xf32, #tpu.memory_space<vmem>>) attributes {dimension_semantics = [#tpu.dimension_semantics<parallel>, #tpu.dimension_semantics<parallel>], iteration_bounds = array<i64: 2, 1>, scalar_prefetch = 0 : i64, scratch_operands = 0 : i64, tpu.core_type = #tpu.core_type<tc>, window_params = [{transform_indices = @transform_0, window_bounds = array<i64: 1, 8, 32>}, {transform_indices = @transform_1, window_bounds = array<i64: 8, 32>}, {pipeline_mode = #tpu.pipeline_mode<synchronous>, transform_indices = @transform_2, window_bounds = array<i64: 32, 32>}, {pipeline_mode = #tpu.pipeline_mode<synchronous>, transform_indices = @transform_3, window_bounds = array<i64: 1, 32>}, {pipeline_mode = #tpu.pipeline_mode<synchronous>, transform_indices = @transform_4, window_bounds = array<i64: 32, 32>}, {pipeline_mode = #tpu.pipeline_mode<synchronous>, transform_indices = @transform_5, window_bounds = array<i64: 1, 32>}, {pipeline_mode = #tpu.pipeline_mode<synchronous>, transform_indices = @transform_6, window_bounds = array<i64: 32, 32>}, {pipeline_mode = #tpu.pipeline_mode<synchronous>, transform_indices = @transform_7, window_bounds = array<i64: 1, 32>}, {pipeline_mode = #tpu.pipeline_mode<synchronous>, transform_indices = @transform_8, window_bounds = array<i64: 32, 32>}, {pipeline_mode = #tpu.pipeline_mode<synchronous>, transform_indices = @transform_9, window_bounds = array<i64: 1, 32>}, {pipeline_mode = #tpu.pipeline_mode<synchronous>, transform_indices = @transform_10, window_bounds = array<i64: 32, 32>}, {pipeline_mode = #tpu.pipeline_mode<synchronous>, transform_indices = @transform_11, window_bounds = array<i64: 1, 32>}, {pipeline_mode = #tpu.pipeline_mode<synchronous>, transform_indices = @transform_12, window_bounds = array<i64: 32, 32>}, {pipeline_mode = #tpu.pipeline_mode<synchronous>, transform_indices = @transform_13, window_bounds = array<i64: 1, 32>}, {transform_indices = @transform_14, window_bounds = array<i64: 1, 8, 32>}, {transform_indices = @transform_15, window_bounds = array<i64: 1, 8, 32>}, {transform_indices = @transform_16, window_bounds = array<i64: 1, 8, 32>}]} {
    %c0 = arith.constant 0 : index
    %c0_0 = arith.constant 0 : index
    %c0_1 = arith.constant 0 : index
    %0 = vector.load %arg2[%c0, %c0_0, %c0_1] : memref<1x8x32xf32, #tpu.memory_space<vmem>>, vector<1x8x32xf32>
    %1 = vector.shape_cast %0 : vector<1x8x32xf32> to vector<8x32xf32>
    %c0_2 = arith.constant 0 : index
    %c0_3 = arith.constant 0 : index
    %2 = vector.load %arg3[%c0_2, %c0_3] : memref<8x32xf32, #tpu.memory_space<vmem>>, vector<8x32xf32>
    %3 = arith.addf %1, %2 : vector<8x32xf32>
    %c0_4 = arith.constant 0 : index
    %c0_5 = arith.constant 0 : index
    %4 = vector.load %arg4[%c0_4, %c0_5] : memref<32x32xf32, #tpu.memory_space<vmem>>, vector<32x32xf32>
    %cst = arith.constant dense<0.000000e+00> : vector<8x32xf32>
    %5 = tpu.matmul %3, %4, %cst {dimension_numbers = #tpu.dot_dimension_numbers<[1], [0], [0], [1], [0, 0, 1, 1], [], []>} : vector<8x32xf32>, vector<32x32xf32>, vector<8x32xf32> -> vector<8x32xf32>
    %c0_6 = arith.constant 0 : index
    %c0_7 = arith.constant 0 : index
    %6 = vector.load %arg5[%c0_6, %c0_7] : memref<1x32xf32, #tpu.memory_space<vmem>>, vector<1x32xf32>
    %7 = vector.broadcast %6 : vector<1x32xf32> to vector<8x32xf32>
    %8 = arith.addf %5, %7 : vector<8x32xf32>
    %c0_8 = arith.constant 0 : index
    %c0_9 = arith.constant 0 : index
    %9 = vector.load %arg10[%c0_8, %c0_9] : memref<32x32xf32, #tpu.memory_space<vmem>>, vector<32x32xf32>
    %cst_10 = arith.constant dense<0.000000e+00> : vector<8x32xf32>
    %10 = tpu.matmul %8, %9, %cst_10 {dimension_numbers = #tpu.dot_dimension_numbers<[1], [0], [0], [1], [0, 0, 1, 1], [], []>} : vector<8x32xf32>, vector<32x32xf32>, vector<8x32xf32> -> vector<8x32xf32>
    %c0_11 = arith.constant 0 : index
    %c0_12 = arith.constant 0 : index
    %11 = vector.load %arg11[%c0_11, %c0_12] : memref<1x32xf32, #tpu.memory_space<vmem>>, vector<1x32xf32>
    %12 = vector.broadcast %11 : vector<1x32xf32> to vector<8x32xf32>
    %13 = arith.addf %10, %12 : vector<8x32xf32>
    %c0_13 = arith.constant 0 : index
    %c0_14 = arith.constant 0 : index
    %c0_15 = arith.constant 0 : index
    %14 = vector.load %arg16[%c0_13, %c0_14, %c0_15] : memref<1x8x32xf32, #tpu.memory_space<vmem>>, vector<1x8x32xf32>
    %15 = vector.shape_cast %14 : vector<1x8x32xf32> to vector<8x32xf32>
    %16 = vector.shape_cast %13 : vector<8x32xf32> to vector<1x8x32xf32>
    tpu.vector_store %arg16[%c0_13, %c0_14, %c0_15], %16 {strides = array<i32>} : memref<1x8x32xf32, #tpu.memory_space<vmem>>, vector<1x8x32xf32>,
    %c0_16 = arith.constant 0 : index
    %c0_17 = arith.constant 0 : index
    %17 = vector.load %arg6[%c0_16, %c0_17] : memref<32x32xf32, #tpu.memory_space<vmem>>, vector<32x32xf32>
    %cst_18 = arith.constant dense<0.000000e+00> : vector<8x32xf32>
    %18 = tpu.matmul %3, %17, %cst_18 {dimension_numbers = #tpu.dot_dimension_numbers<[1], [0], [0], [1], [0, 0, 1, 1], [], []>} : vector<8x32xf32>, vector<32x32xf32>, vector<8x32xf32> -> vector<8x32xf32>
    %c0_19 = arith.constant 0 : index
    %c0_20 = arith.constant 0 : index
    %19 = vector.load %arg7[%c0_19, %c0_20] : memref<1x32xf32, #tpu.memory_space<vmem>>, vector<1x32xf32>
    %20 = vector.broadcast %19 : vector<1x32xf32> to vector<8x32xf32>
    %21 = arith.addf %18, %20 : vector<8x32xf32>
    %c0_21 = arith.constant 0 : index
    %c0_22 = arith.constant 0 : index
    %22 = vector.load %arg12[%c0_21, %c0_22] : memref<32x32xf32, #tpu.memory_space<vmem>>, vector<32x32xf32>
    %cst_23 = arith.constant dense<0.000000e+00> : vector<8x32xf32>
    %23 = tpu.matmul %21, %22, %cst_23 {dimension_numbers = #tpu.dot_dimension_numbers<[1], [0], [0], [1], [0, 0, 1, 1], [], []>} : vector<8x32xf32>, vector<32x32xf32>, vector<8x32xf32> -> vector<8x32xf32>
    %c0_24 = arith.constant 0 : index
    %c0_25 = arith.constant 0 : index
    %24 = vector.load %arg13[%c0_24, %c0_25] : memref<1x32xf32, #tpu.memory_space<vmem>>, vector<1x32xf32>
    %25 = vector.broadcast %24 : vector<1x32xf32> to vector<8x32xf32>
    %26 = arith.addf %23, %25 : vector<8x32xf32>
    %c0_26 = arith.constant 0 : index
    %c0_27 = arith.constant 0 : index
    %c0_28 = arith.constant 0 : index
    %27 = vector.load %arg17[%c0_26, %c0_27, %c0_28] : memref<1x8x32xf32, #tpu.memory_space<vmem>>, vector<1x8x32xf32>
    %28 = vector.shape_cast %27 : vector<1x8x32xf32> to vector<8x32xf32>
    %29 = vector.shape_cast %26 : vector<8x32xf32> to vector<1x8x32xf32>
    tpu.vector_store %arg17[%c0_26, %c0_27, %c0_28], %29 {strides = array<i32>} : memref<1x8x32xf32, #tpu.memory_space<vmem>>, vector<1x8x32xf32>,
    %c0_29 = arith.constant 0 : index
    %c0_30 = arith.constant 0 : index
    %30 = vector.load %arg8[%c0_29, %c0_30] : memref<32x32xf32, #tpu.memory_space<vmem>>, vector<32x32xf32>
    %cst_31 = arith.constant dense<0.000000e+00> : vector<8x32xf32>
    %31 = tpu.matmul %3, %30, %cst_31 {dimension_numbers = #tpu.dot_dimension_numbers<[1], [0], [0], [1], [0, 0, 1, 1], [], []>} : vector<8x32xf32>, vector<32x32xf32>, vector<8x32xf32> -> vector<8x32xf32>
    %c0_32 = arith.constant 0 : index
    %c0_33 = arith.constant 0 : index
    %32 = vector.load %arg9[%c0_32, %c0_33] : memref<1x32xf32, #tpu.memory_space<vmem>>, vector<1x32xf32>
    %33 = vector.broadcast %32 : vector<1x32xf32> to vector<8x32xf32>
    %34 = arith.addf %31, %33 : vector<8x32xf32>
    %c0_34 = arith.constant 0 : index
    %c0_35 = arith.constant 0 : index
    %35 = vector.load %arg14[%c0_34, %c0_35] : memref<32x32xf32, #tpu.memory_space<vmem>>, vector<32x32xf32>
    %cst_36 = arith.constant dense<0.000000e+00> : vector<8x32xf32>
    %36 = tpu.matmul %34, %35, %cst_36 {dimension_numbers = #tpu.dot_dimension_numbers<[1], [0], [0], [1], [0, 0, 1, 1], [], []>} : vector<8x32xf32>, vector<32x32xf32>, vector<8x32xf32> -> vector<8x32xf32>
    %c0_37 = arith.constant 0 : index
    %c0_38 = arith.constant 0 : index
    %37 = vector.load %arg15[%c0_37, %c0_38] : memref<1x32xf32, #tpu.memory_space<vmem>>, vector<1x32xf32>
    %38 = vector.broadcast %37 : vector<1x32xf32> to vector<8x32xf32>
    %39 = arith.addf %36, %38 : vector<8x32xf32>
    %c0_39 = arith.constant 0 : index
    %c0_40 = arith.constant 0 : index
    %c0_41 = arith.constant 0 : index
    %40 = vector.load %arg18[%c0_39, %c0_40, %c0_41] : memref<1x8x32xf32, #tpu.memory_space<vmem>>, vector<1x8x32xf32>
    %41 = vector.shape_cast %40 : vector<1x8x32xf32> to vector<8x32xf32>
    %42 = vector.shape_cast %39 : vector<8x32xf32> to vector<1x8x32xf32>
    tpu.vector_store %arg18[%c0_39, %c0_40, %c0_41], %42 {strides = array<i32>} : memref<1x8x32xf32, #tpu.memory_space<vmem>>, vector<1x8x32xf32>,
    return
  }
  func.func @transform_0(%arg0: i32, %arg1: i32) -> (i32, i32, i32) {
    %c0_i32 = arith.constant 0 : i32
    %c0_i32_0 = arith.constant 0 : i32
    return %arg0, %arg1, %c0_i32 : i32, i32, i32
  }
  func.func @transform_1(%arg0: i32, %arg1: i32) -> (i32, i32) {
    %c0_i32 = arith.constant 0 : i32
    %c0_i32_0 = arith.constant 0 : i32
    return %arg1, %c0_i32 : i32, i32
  }
  func.func @transform_2(%arg0: i32, %arg1: i32) -> (i32, i32) {
    %c0_i32 = arith.constant 0 : i32
    %c0_i32_0 = arith.constant 0 : i32
    %c0_i32_1 = arith.constant 0 : i32
    return %c0_i32, %c0_i32_0 : i32, i32
  }
  func.func @transform_3(%arg0: i32, %arg1: i32) -> (i32, i32) {
    %c0_i32 = arith.constant 0 : i32
    %c0_i32_0 = arith.constant 0 : i32
    %c0_i32_1 = arith.constant 0 : i32
    return %c0_i32, %c0_i32_0 : i32, i32
  }
  func.func @transform_4(%arg0: i32, %arg1: i32) -> (i32, i32) {
    %c0_i32 = arith.constant 0 : i32
    %c0_i32_0 = arith.constant 0 : i32
    %c0_i32_1 = arith.constant 0 : i32
    return %c0_i32, %c0_i32_0 : i32, i32
  }
  func.func @transform_5(%arg0: i32, %arg1: i32) -> (i32, i32) {
    %c0_i32 = arith.constant 0 : i32
    %c0_i32_0 = arith.constant 0 : i32
    %c0_i32_1 = arith.constant 0 : i32
    return %c0_i32, %c0_i32_0 : i32, i32
  }
  func.func @transform_6(%arg0: i32, %arg1: i32) -> (i32, i32) {
    %c0_i32 = arith.constant 0 : i32
    %c0_i32_0 = arith.constant 0 : i32
    %c0_i32_1 = arith.constant 0 : i32
    return %c0_i32, %c0_i32_0 : i32, i32
  }
  func.func @transform_7(%arg0: i32, %arg1: i32) -> (i32, i32) {
    %c0_i32 = arith.constant 0 : i32
    %c0_i32_0 = arith.constant 0 : i32
    %c0_i32_1 = arith.constant 0 : i32
    return %c0_i32, %c0_i32_0 : i32, i32
  }
  func.func @transform_8(%arg0: i32, %arg1: i32) -> (i32, i32) {
    %c0_i32 = arith.constant 0 : i32
    %c0_i32_0 = arith.constant 0 : i32
    %c0_i32_1 = arith.constant 0 : i32
    return %c0_i32, %c0_i32_0 : i32, i32
  }
  func.func @transform_9(%arg0: i32, %arg1: i32) -> (i32, i32) {
    %c0_i32 = arith.constant 0 : i32
    %c0_i32_0 = arith.constant 0 : i32
    %c0_i32_1 = arith.constant 0 : i32
    return %c0_i32, %c0_i32_0 : i32, i32
  }
  func.func @transform_10(%arg0: i32, %arg1: i32) -> (i32, i32) {
    %c0_i32 = arith.constant 0 : i32
    %c0_i32_0 = arith.constant 0 : i32
    %c0_i32_1 = arith.constant 0 : i32
    return %c0_i32, %c0_i32_0 : i32, i32
  }
  func.func @transform_11(%arg0: i32, %arg1: i32) -> (i32, i32) {
    %c0_i32 = arith.constant 0 : i32
    %c0_i32_0 = arith.constant 0 : i32
    %c0_i32_1 = arith.constant 0 : i32
    return %c0_i32, %c0_i32_0 : i32, i32
  }
  func.func @transform_12(%arg0: i32, %arg1: i32) -> (i32, i32) {
    %c0_i32 = arith.constant 0 : i32
    %c0_i32_0 = arith.constant 0 : i32
    %c0_i32_1 = arith.constant 0 : i32
    return %c0_i32, %c0_i32_0 : i32, i32
  }
  func.func @transform_13(%arg0: i32, %arg1: i32) -> (i32, i32) {
    %c0_i32 = arith.constant 0 : i32
    %c0_i32_0 = arith.constant 0 : i32
    %c0_i32_1 = arith.constant 0 : i32
    return %c0_i32, %c0_i32_0 : i32, i32
  }
  func.func @transform_14(%arg0: i32, %arg1: i32) -> (i32, i32, i32) {
    %c0_i32 = arith.constant 0 : i32
    %c0_i32_0 = arith.constant 0 : i32
    return %arg0, %arg1, %c0_i32 : i32, i32, i32
  }
  func.func @transform_15(%arg0: i32, %arg1: i32) -> (i32, i32, i32) {
    %c0_i32 = arith.constant 0 : i32
    %c0_i32_0 = arith.constant 0 : i32
    return %arg0, %arg1, %c0_i32 : i32, i32, i32
  }
  func.func @transform_16(%arg0: i32, %arg1: i32) -> (i32, i32, i32) {
    %c0_i32 = arith.constant 0 : i32
    %c0_i32_0 = arith.constant 0 : i32
    return %arg0, %arg1, %c0_i32 : i32, i32, i32
  }
}

</mosaic_0001>

<llo_original>
// kernel: tpu_custom_call.1
$region0: #{tpu_custom_call.1}
  #allocation0 [shape = 'u32[]', space=smem, size = 0x4, offset = 0x4, fixed_abs, tag = 'smem constant byte address 0x4 - core index']
  #allocation1 [shape = 'u32[144,128]{1,0:T(1,128)}', space=vmem, size = 0x12000, scoped, tag = 'internal scratch']
  %s0 = inlined_call_operand.hbm [shape: f32[2,8,32], index: 0, kind: input, shape index: {}]
  %s1 = inlined_call_operand.hbm [shape: f32[8,32], index: 1, kind: input, shape index: {}]
  %s2 = inlined_call_operand.hbm [shape: f32[32,32], index: 2, kind: input, shape index: {}]
  %s3 = inlined_call_operand.vmem [shape: f32[1,32], index: 3, kind: input, shape index: {}]
  %s4 = inlined_call_operand.hbm [shape: f32[32,32], index: 4, kind: input, shape index: {}]
  %s5 = inlined_call_operand.vmem [shape: f32[1,32], index: 5, kind: input, shape index: {}]
  %s6 = inlined_call_operand.hbm [shape: f32[32,32], index: 6, kind: input, shape index: {}]
  %s7 = inlined_call_operand.vmem [shape: f32[1,32], index: 7, kind: input, shape index: {}]
  %s8 = inlined_call_operand.hbm [shape: f32[32,32], index: 8, kind: input, shape index: {}]
  %s9 = inlined_call_operand.vmem [shape: f32[1,32], index: 9, kind: input, shape index: {}]
  %s10 = inlined_call_operand.vmem [shape: f32[32,32], index: 10, kind: input, shape index: {}]
  %s11 = inlined_call_operand.vmem [shape: f32[1,32], index: 11, kind: input, shape index: {}]
  %s12 = inlined_call_operand.hbm [shape: f32[32,32], index: 12, kind: input, shape index: {}]
  %s13 = inlined_call_operand.vmem [shape: f32[1,32], index: 13, kind: input, shape index: {}]
  %s14 = inlined_call_operand.hbm [shape: f32[2,8,32], index: 14, kind: output, shape index: {0}]
  %s15 = inlined_call_operand.hbm [shape: f32[2,8,32], index: 15, kind: output, shape index: {1}]
  %s16 = inlined_call_operand.hbm [shape: f32[2,8,32], index: 16, kind: output, shape index: {2}]
  %17 = xla_tuple %s14, %s15, %s16
  %s18 = sld [smem:[#allocation0]]
  $region133: #{tpu_custom_call.1} parent=0
    _
  %s20 = ssub.s32 1, %s18
  %s21 = scalar_select 0, %s20, %s18
  $region1: #{tpu_custom_call.1} parent=0
    #allocation2 [shape = 'u8[8192]{0}', space=vmem, size = 0x2000, scoped, tag = 'input window, operand 0']
    #allocation3 [shape = 's32[2]{0}', space=sflag, size = 0x8, scoped, tag = 'scoped memory for tpu_custom_call.1']
    #allocation4 [shape = 's32[2]{0}', space=sflag, size = 0x8, scoped, tag = 'scoped memory for tpu_custom_call.1']
    #allocation5 [shape = 'u8[4096]{0}', space=vmem, size = 0x1000, scoped, tag = 'input window, operand 1, single buffered']
    #allocation6 [shape = 's32[1]{0}', space=sflag, size = 0x4, scoped, tag = 'scoped memory for tpu_custom_call.1']
    #allocation7 [shape = 'u8[16384]{0}', space=vmem, size = 0x4000, scoped, tag = 'input window, operand 2, single buffered']
    #allocation8 [shape = 'u8[16384]{0}', space=vmem, size = 0x4000, scoped, tag = 'input window, operand 4, single buffered']
    #allocation9 [shape = 's32[1]{0}', space=sflag, size = 0x4, scoped, tag = 'scoped memory for tpu_custom_call.1']
    #allocation10 [shape = 'u8[16384]{0}', space=vmem, size = 0x4000, scoped, tag = 'input window, operand 6, single buffered']
    #allocation11 [shape = 'u8[16384]{0}', space=vmem, size = 0x4000, scoped, tag = 'input window, operand 8, single buffered']
    #allocation12 [shape = 's32[1]{0}', space=sflag, size = 0x4, scoped, tag = 'scoped memory for tpu_custom_call.1']
    #allocation13 [shape = 'u8[16384]{0}', space=vmem, size = 0x4000, scoped, tag = 'input window, operand 12, single buffered']
    #allocation14 [shape = 'u8[8192]{0}', space=vmem, size = 0x2000, scoped, tag = 'output window, operand 0']
    #allocation15 [shape = 'u8[8192]{0}', space=vmem, size = 0x2000, scoped, tag = 'output window, operand 1']
    #allocation16 [shape = 's32[2]{0}', space=sflag, size = 0x8, scoped, tag = 'scoped memory for tpu_custom_call.1']
    #allocation17 [shape = 'u8[8192]{0}', space=vmem, size = 0x2000, scoped, tag = 'output window, operand 2']
    %22 = vsyncpa [#allocation3], 0
    %s23 = scalar_lea.sflag [#allocation3], 1
    %24 = vsyncpa %s23, 0
    %25 = vsyncpa [#allocation6], 0
    %26 = vsyncpa [#allocation9], 0
    %27 = vsyncpa [#allocation12], 0
    %28 = vsyncpa [#allocation4], 0
    %s29 = scalar_lea.sflag [#allocation4], 1
    %30 = vsyncpa %s29, 0
    %31 = vsyncpa [#allocation16], 0
    %s32 = scalar_lea.sflag [#allocation16], 1
    %33 = vsyncpa %s32, 0
    loop: start=0, step=1, limit=4
    $region2: #{tpu_custom_call.1} parent=1 // loop_pre_header
      _
    $region3: #{tpu_custom_call.1} parent=1 // loop_header
      %s35 = sphi 0, %s39
      %p36 = scmp.ge.s32.totalorder %s35, 4
      %s42 = sphi 0, %s54
      %s43 = sphi 0, %s50
      %s44 = sphi 0, %s42
      %s45 = sphi 0, %s43
      %s46 = sphi 0, %s44
      %s47 = sphi 0, %s45
      %s59 = sphi 0, %s61
      %s62 = sphi 0, %s59
      %s63 = sphi 0, %s62
      %s79 = sphi 0, %s63
      %s85 = sphi 0, %s87
      %s88 = sphi 0, %s85
      %s89 = sphi 0, %s88
      %s105 = sphi 0, %s89
      %s109 = sphi 0, %s109
      %s111 = sphi 0, %s109
      %s112 = sphi 0, %s111
      %s126 = sphi 0, %s112
      %s130 = sphi 0, %s130
      %s132 = sphi 0, %s130
      %s133 = sphi 0, %s132
      %s147 = sphi 0, %s133
      %s151 = sphi 0, %s151
      %s153 = sphi 0, %s151
      %s154 = sphi 0, %s153
      %s168 = sphi 0, %s154
      %s172 = sphi 0, %s172
      %s174 = sphi 0, %s172
      %s175 = sphi 0, %s174
      %s189 = sphi 0, %s175
      %s193 = sphi 0, %s193
      %s195 = sphi 0, %s193
      %s196 = sphi 0, %s195
      %s210 = sphi 0, %s196
      %s214 = sphi 0, %s214
      %s216 = sphi 0, %s214
      %s217 = sphi 0, %s216
      %s231 = sphi 0, %s217
      %s235 = sphi 0, %s235
      %s237 = sphi 0, %s235
      %s238 = sphi 0, %s237
      %s252 = sphi 0, %s238
      %s256 = sphi 0, %s256
      %s258 = sphi 0, %s256
      %s259 = sphi 0, %s258
      %s273 = sphi 0, %s259
      %s277 = sphi 0, %s277
      %s279 = sphi 0, %s277
      %s280 = sphi 0, %s279
      %s294 = sphi 0, %s280
      %s298 = sphi 0, %s298
      %s300 = sphi 0, %s298
      %s301 = sphi 0, %s300
      %s315 = sphi 0, %s301
      %s319 = sphi 0, %s319
      %s321 = sphi 0, %s319
      %s322 = sphi 0, %s321
      %s336 = sphi 0, %s322
      %s340 = sphi 0, %s340
      %s342 = sphi 0, %s340
      %s343 = sphi 0, %s342
      %s357 = sphi 0, %s343
      %s365 = sphi 0, %s367
      %s368 = sphi 0, %s365
      %s369 = sphi 0, %s368
      %s385 = sphi 0, %s369
      %s393 = sphi 0, %s395
      %s396 = sphi 0, %s393
      %s397 = sphi 0, %s396
      %s413 = sphi 0, %s397
      %s421 = sphi 0, %s423
      %s424 = sphi 0, %s421
      %s425 = sphi 0, %s424
      %s441 = sphi 0, %s425
    $region4: #{tpu_custom_call.1} parent=1 // loop_header_branch
      %38 = sbr.rel (%p36) target = $region8
    $region5: #{tpu_custom_call.1} parent=1 // loop_body
      %s40 = ssub.s32 %s35, 1
      %s41 = ssub.s32 %s35, 2
      %s48 = sadd.s32 1, %s43
      %p49 = scmp.ge.s32.totalorder %s48, 1
      %s50 = scalar_select %p49, 0, %s48
      %s51 = sadd.s32 1, %s42
      %s52 = scalar_select %p49, %s51, %s42
      %p53 = scmp.ge.s32.totalorder %s52, 2
      %s54 = scalar_select %p53, 0, %s52
      %s55 = ssub.s32 %s42, %s54
      %s56 = ssub.s32 %s43, %s50
      %s57 = sor.u32 %s55, %s56
      %p58 = scmp.eq.s32.totalorder %s57, 0
      %s60 = sadd.s32 %s59, 1
      %s61 = scalar_select %p58, %s59, %s60
      %p64 = pneg %p58
      %p65 = scmp.eq.s32.totalorder %s35, 1
      %p66 = por %p64, %p65
      %p67 = scmp.ne.s32.totalorder %s59, %s62
      %p68 = scmp.eq.s32.totalorder %s35, 0
      %p69 = por %p67, %p68
      %p70 = scmp.ne.s32.totalorder %s59, %s62
      %p71 = scmp.eq.s32.totalorder %s40, 1
      %p72 = por %p70, %p71
      %p73 = scmp.ne.s32.totalorder %s62, %s63
      %p74 = scmp.eq.s32.totalorder %s40, 0
      %p75 = por %p73, %p74
      %p76 = scmp.ne.s32.totalorder %s62, %s63
      %p77 = scmp.eq.s32.totalorder %s41, 1
      %p78 = por %p76, %p77
      %p80 = scmp.ne.s32.totalorder %s63, %s79
      %p81 = scmp.eq.s32.totalorder %s41, 0
      %p82 = por %p80, %p81
      %s83 = ssub.s32 %s43, %s50
      %p84 = scmp.eq.s32.totalorder %s83, 0
      %s86 = sadd.s32 %s85, 1
      %s87 = scalar_select %p84, %s85, %s86
      %p90 = pneg %p84
      %p91 = scmp.eq.s32.totalorder %s35, 1
      %p92 = por %p90, %p91
      %p93 = scmp.ne.s32.totalorder %s85, %s88
      %p94 = scmp.eq.s32.totalorder %s35, 0
      %p95 = por %p93, %p94
      %p96 = scmp.ne.s32.totalorder %s85, %s88
      %p97 = scmp.eq.s32.totalorder %s40, 1
      %p98 = por %p96, %p97
      %p99 = scmp.ne.s32.totalorder %s88, %s89
      %p100 = scmp.eq.s32.totalorder %s40, 0
      %p101 = por %p99, %p100
      %p102 = scmp.ne.s32.totalorder %s88, %s89
      %p103 = scmp.eq.s32.totalorder %s41, 1
      %p104 = por %p102, %p103
      %p106 = scmp.ne.s32.totalorder %s89, %s105
      %p107 = scmp.eq.s32.totalorder %s41, 0
      %p108 = por %p106, %p107
      %s110 = sadd.s32 %s109, 1
      %p113 = scmp.eq.s32.totalorder %s35, 1
      %p114 = scmp.ne.s32.totalorder %s109, %s111
      %p115 = scmp.eq.s32.totalorder %s35, 0
      %p116 = por %p114, %p115
      %p117 = scmp.ne.s32.totalorder %s109, %s111
      %p118 = scmp.eq.s32.totalorder %s40, 1
      %p119 = por %p117, %p118
      %p120 = scmp.ne.s32.totalorder %s111, %s112
      %p121 = scmp.eq.s32.totalorder %s40, 0
      %p122 = por %p120, %p121
      %p123 = scmp.ne.s32.totalorder %s111, %s112
      %p124 = scmp.eq.s32.totalorder %s41, 1
      %p125 = por %p123, %p124
      %p127 = scmp.ne.s32.totalorder %s112, %s126
      %p128 = scmp.eq.s32.totalorder %s41, 0
      %p129 = por %p127, %p128
      %s131 = sadd.s32 %s130, 1
      %p134 = scmp.eq.s32.totalorder %s35, 1
      %p135 = scmp.ne.s32.totalorder %s130, %s132
      %p136 = scmp.eq.s32.totalorder %s35, 0
      %p137 = por %p135, %p136
      %p138 = scmp.ne.s32.totalorder %s130, %s132
      %p139 = scmp.eq.s32.totalorder %s40, 1
      %p140 = por %p138, %p139
      %p141 = scmp.ne.s32.totalorder %s132, %s133
      %p142 = scmp.eq.s32.totalorder %s40, 0
      %p143 = por %p141, %p142
      %p144 = scmp.ne.s32.totalorder %s132, %s133
      %p145 = scmp.eq.s32.totalorder %s41, 1
      %p146 = por %p144, %p145
      %p148 = scmp.ne.s32.totalorder %s133, %s147
      %p149 = scmp.eq.s32.totalorder %s41, 0
      %p150 = por %p148, %p149
      %s152 = sadd.s32 %s151, 1
      %p155 = scmp.eq.s32.totalorder %s35, 1
      %p156 = scmp.ne.s32.totalorder %s151, %s153
      %p157 = scmp.eq.s32.totalorder %s35, 0
      %p158 = por %p156, %p157
      %p159 = scmp.ne.s32.totalorder %s151, %s153
      %p160 = scmp.eq.s32.totalorder %s40, 1
      %p161 = por %p159, %p160
      %p162 = scmp.ne.s32.totalorder %s153, %s154
      %p163 = scmp.eq.s32.totalorder %s40, 0
      %p164 = por %p162, %p163
      %p165 = scmp.ne.s32.totalorder %s153, %s154
      %p166 = scmp.eq.s32.totalorder %s41, 1
      %p167 = por %p165, %p166
      %p169 = scmp.ne.s32.totalorder %s154, %s168
      %p170 = scmp.eq.s32.totalorder %s41, 0
      %p171 = por %p169, %p170
      %s173 = sadd.s32 %s172, 1
      %p176 = scmp.eq.s32.totalorder %s35, 1
      %p177 = scmp.ne.s32.totalorder %s172, %s174
      %p178 = scmp.eq.s32.totalorder %s35, 0
      %p179 = por %p177, %p178
      %p180 = scmp.ne.s32.totalorder %s172, %s174
      %p181 = scmp.eq.s32.totalorder %s40, 1
      %p182 = por %p180, %p181
      %p183 = scmp.ne.s32.totalorder %s174, %s175
      %p184 = scmp.eq.s32.totalorder %s40, 0
      %p185 = por %p183, %p184
      %p186 = scmp.ne.s32.totalorder %s174, %s175
      %p187 = scmp.eq.s32.totalorder %s41, 1
      %p188 = por %p186, %p187
      %p190 = scmp.ne.s32.totalorder %s175, %s189
      %p191 = scmp.eq.s32.totalorder %s41, 0
      %p192 = por %p190, %p191
      %s194 = sadd.s32 %s193, 1
      %p197 = scmp.eq.s32.totalorder %s35, 1
      %p198 = scmp.ne.s32.totalorder %s193, %s195
      %p199 = scmp.eq.s32.totalorder %s35, 0
      %p200 = por %p198, %p199
      %p201 = scmp.ne.s32.totalorder %s193, %s195
      %p202 = scmp.eq.s32.totalorder %s40, 1
      %p203 = por %p201, %p202
      %p204 = scmp.ne.s32.totalorder %s195, %s196
      %p205 = scmp.eq.s32.totalorder %s40, 0
      %p206 = por %p204, %p205
      %p207 = scmp.ne.s32.totalorder %s195, %s196
      %p208 = scmp.eq.s32.totalorder %s41, 1
      %p209 = por %p207, %p208
      %p211 = scmp.ne.s32.totalorder %s196, %s210
      %p212 = scmp.eq.s32.totalorder %s41, 0
      %p213 = por %p211, %p212
      %s215 = sadd.s32 %s214, 1
      %p218 = scmp.eq.s32.totalorder %s35, 1
      %p219 = scmp.ne.s32.totalorder %s214, %s216
      %p220 = scmp.eq.s32.totalorder %s35, 0
      %p221 = por %p219, %p220
      %p222 = scmp.ne.s32.totalorder %s214, %s216
      %p223 = scmp.eq.s32.totalorder %s40, 1
      %p224 = por %p222, %p223
      %p225 = scmp.ne.s32.totalorder %s216, %s217
      %p226 = scmp.eq.s32.totalorder %s40, 0
      %p227 = por %p225, %p226
      %p228 = scmp.ne.s32.totalorder %s216, %s217
      %p229 = scmp.eq.s32.totalorder %s41, 1
      %p230 = por %p228, %p229
      %p232 = scmp.ne.s32.totalorder %s217, %s231
      %p233 = scmp.eq.s32.totalorder %s41, 0
      %p234 = por %p232, %p233
      %s236 = sadd.s32 %s235, 1
      %p239 = scmp.eq.s32.totalorder %s35, 1
      %p240 = scmp.ne.s32.totalorder %s235, %s237
      %p241 = scmp.eq.s32.totalorder %s35, 0
      %p242 = por %p240, %p241
      %p243 = scmp.ne.s32.totalorder %s235, %s237
      %p244 = scmp.eq.s32.totalorder %s40, 1
      %p245 = por %p243, %p244
      %p246 = scmp.ne.s32.totalorder %s237, %s238
      %p247 = scmp.eq.s32.totalorder %s40, 0
      %p248 = por %p246, %p247
      %p249 = scmp.ne.s32.totalorder %s237, %s238
      %p250 = scmp.eq.s32.totalorder %s41, 1
      %p251 = por %p249, %p250
      %p253 = scmp.ne.s32.totalorder %s238, %s252
      %p254 = scmp.eq.s32.totalorder %s41, 0
      %p255 = por %p253, %p254
      %s257 = sadd.s32 %s256, 1
      %p260 = scmp.eq.s32.totalorder %s35, 1
      %p261 = scmp.ne.s32.totalorder %s256, %s258
      %p262 = scmp.eq.s32.totalorder %s35, 0
      %p263 = por %p261, %p262
      %p264 = scmp.ne.s32.totalorder %s256, %s258
      %p265 = scmp.eq.s32.totalorder %s40, 1
      %p266 = por %p264, %p265
      %p267 = scmp.ne.s32.totalorder %s258, %s259
      %p268 = scmp.eq.s32.totalorder %s40, 0
      %p269 = por %p267, %p268
      %p270 = scmp.ne.s32.totalorder %s258, %s259
      %p271 = scmp.eq.s32.totalorder %s41, 1
      %p272 = por %p270, %p271
      %p274 = scmp.ne.s32.totalorder %s259, %s273
      %p275 = scmp.eq.s32.totalorder %s41, 0
      %p276 = por %p274, %p275
      %s278 = sadd.s32 %s277, 1
      %p281 = scmp.eq.s32.totalorder %s35, 1
      %p282 = scmp.ne.s32.totalorder %s277, %s279
      %p283 = scmp.eq.s32.totalorder %s35, 0
      %p284 = por %p282, %p283
      %p285 = scmp.ne.s32.totalorder %s277, %s279
      %p286 = scmp.eq.s32.totalorder %s40, 1
      %p287 = por %p285, %p286
      %p288 = scmp.ne.s32.totalorder %s279, %s280
      %p289 = scmp.eq.s32.totalorder %s40, 0
      %p290 = por %p288, %p289
      %p291 = scmp.ne.s32.totalorder %s279, %s280
      %p292 = scmp.eq.s32.totalorder %s41, 1
      %p293 = por %p291, %p292
      %p295 = scmp.ne.s32.totalorder %s280, %s294
      %p296 = scmp.eq.s32.totalorder %s41, 0
      %p297 = por %p295, %p296
      %s299 = sadd.s32 %s298, 1
      %p302 = scmp.eq.s32.totalorder %s35, 1
      %p303 = scmp.ne.s32.totalorder %s298, %s300
      %p304 = scmp.eq.s32.totalorder %s35, 0
      %p305 = por %p303, %p304
      %p306 = scmp.ne.s32.totalorder %s298, %s300
      %p307 = scmp.eq.s32.totalorder %s40, 1
      %p308 = por %p306, %p307
      %p309 = scmp.ne.s32.totalorder %s300, %s301
      %p310 = scmp.eq.s32.totalorder %s40, 0
      %p311 = por %p309, %p310
      %p312 = scmp.ne.s32.totalorder %s300, %s301
      %p313 = scmp.eq.s32.totalorder %s41, 1
      %p314 = por %p312, %p313
      %p316 = scmp.ne.s32.totalorder %s301, %s315
      %p317 = scmp.eq.s32.totalorder %s41, 0
      %p318 = por %p316, %p317
      %s320 = sadd.s32 %s319, 1
      %p323 = scmp.eq.s32.totalorder %s35, 1
      %p324 = scmp.ne.s32.totalorder %s319, %s321
      %p325 = scmp.eq.s32.totalorder %s35, 0
      %p326 = por %p324, %p325
      %p327 = scmp.ne.s32.totalorder %s319, %s321
      %p328 = scmp.eq.s32.totalorder %s40, 1
      %p329 = por %p327, %p328
      %p330 = scmp.ne.s32.totalorder %s321, %s322
      %p331 = scmp.eq.s32.totalorder %s40, 0
      %p332 = por %p330, %p331
      %p333 = scmp.ne.s32.totalorder %s321, %s322
      %p334 = scmp.eq.s32.totalorder %s41, 1
      %p335 = por %p333, %p334
      %p337 = scmp.ne.s32.totalorder %s322, %s336
      %p338 = scmp.eq.s32.totalorder %s41, 0
      %p339 = por %p337, %p338
      %s341 = sadd.s32 %s340, 1
      %p344 = scmp.eq.s32.totalorder %s35, 1
      %p345 = scmp.ne.s32.totalorder %s340, %s342
      %p346 = scmp.eq.s32.totalorder %s35, 0
      %p347 = por %p345, %p346
      %p348 = scmp.ne.s32.totalorder %s340, %s342
      %p349 = scmp.eq.s32.totalorder %s40, 1
      %p350 = por %p348, %p349
      %p351 = scmp.ne.s32.totalorder %s342, %s343
      %p352 = scmp.eq.s32.totalorder %s40, 0
      %p353 = por %p351, %p352
      %p354 = scmp.ne.s32.totalorder %s342, %s343
      %p355 = scmp.eq.s32.totalorder %s41, 1
      %p356 = por %p354, %p355
      %p358 = scmp.ne.s32.totalorder %s343, %s357
      %p359 = scmp.eq.s32.totalorder %s41, 0
      %p360 = por %p358, %p359
      %s361 = ssub.s32 %s42, %s54
      %s362 = ssub.s32 %s43, %s50
      %s363 = sor.u32 %s361, %s362
      %p364 = scmp.eq.s32.totalorder %s363, 0
      %s366 = sadd.s32 %s365, 1
      %s367 = scalar_select %p364, %s365, %s366
      %p370 = pneg %p364
      %p371 = scmp.eq.s32.totalorder %s35, 1
      %p372 = por %p370, %p371
      %p373 = scmp.ne.s32.totalorder %s365, %s368
      %p374 = scmp.eq.s32.totalorder %s35, 0
      %p375 = por %p373, %p374
      %p376 = scmp.ne.s32.totalorder %s365, %s368
      %p377 = scmp.eq.s32.totalorder %s40, 1
      %p378 = por %p376, %p377
      %p379 = scmp.ne.s32.totalorder %s368, %s369
      %p380 = scmp.eq.s32.totalorder %s40, 0
      %p381 = por %p379, %p380
      %p382 = scmp.ne.s32.totalorder %s368, %s369
      %p383 = scmp.eq.s32.totalorder %s41, 1
      %p384 = por %p382, %p383
      %p386 = scmp.ne.s32.totalorder %s369, %s385
      %p387 = scmp.eq.s32.totalorder %s41, 0
      %p388 = por %p386, %p387
      %s389 = ssub.s32 %s42, %s54
      %s390 = ssub.s32 %s43, %s50
      %s391 = sor.u32 %s389, %s390
      %p392 = scmp.eq.s32.totalorder %s391, 0
      %s394 = sadd.s32 %s393, 1
      %s395 = scalar_select %p392, %s393, %s394
      %p398 = pneg %p392
      %p399 = scmp.eq.s32.totalorder %s35, 1
      %p400 = por %p398, %p399
      %p401 = scmp.ne.s32.totalorder %s393, %s396
      %p402 = scmp.eq.s32.totalorder %s35, 0
      %p403 = por %p401, %p402
      %p404 = scmp.ne.s32.totalorder %s393, %s396
      %p405 = scmp.eq.s32.totalorder %s40, 1
      %p406 = por %p404, %p405
      %p407 = scmp.ne.s32.totalorder %s396, %s397
      %p408 = scmp.eq.s32.totalorder %s40, 0
      %p409 = por %p407, %p408
      %p410 = scmp.ne.s32.totalorder %s396, %s397
      %p411 = scmp.eq.s32.totalorder %s41, 1
      %p412 = por %p410, %p411
      %p414 = scmp.ne.s32.totalorder %s397, %s413
      %p415 = scmp.eq.s32.totalorder %s41, 0
      %p416 = por %p414, %p415
      %s417 = ssub.s32 %s42, %s54
      %s418 = ssub.s32 %s43, %s50
      %s419 = sor.u32 %s417, %s418
      %p420 = scmp.eq.s32.totalorder %s419, 0
      %s422 = sadd.s32 %s421, 1
      %s423 = scalar_select %p420, %s421, %s422
      %p426 = pneg %p420
      %p427 = scmp.eq.s32.totalorder %s35, 1
      %p428 = por %p426, %p427
      %p429 = scmp.ne.s32.totalorder %s421, %s424
      %p430 = scmp.eq.s32.totalorder %s35, 0
      %p431 = por %p429, %p430
      %p432 = scmp.ne.s32.totalorder %s421, %s424
      %p433 = scmp.eq.s32.totalorder %s40, 1
      %p434 = por %p432, %p433
      %p435 = scmp.ne.s32.totalorder %s424, %s425
      %p436 = scmp.eq.s32.totalorder %s40, 0
      %p437 = por %p435, %p436
      %p438 = scmp.ne.s32.totalorder %s424, %s425
      %p439 = scmp.eq.s32.totalorder %s41, 1
      %p440 = por %p438, %p439
      %p442 = scmp.ne.s32.totalorder %s425, %s441
      %p443 = scmp.eq.s32.totalorder %s41, 0
      %p444 = por %p442, %p443
      %p445 = scmp.le.s32.totalorder 1, %s35
      %p446 = scmp.lt.s32.totalorder %s35, 3
      %p447 = pnand %p445, %p446
      %p448 = pneg %p447
      // Predicated region
      $region9: #{tpu_custom_call.1} parent=5 // pred_check
        _
      $region10: #{tpu_custom_call.1} parent=5 // pred_check_branch
        %450 = sbr.rel (%p447) target = $region12
      $region11: #{tpu_custom_call.1} parent=5 // pred_region
        %s451 = ssub.s32 %s35, 1
        // Predicated region
        $region13: #{tpu_custom_call.1} parent=11 // pred_check
          %p452 = pneg %p101
        $region14: #{tpu_custom_call.1} parent=11 // pred_check_branch
          %454 = sbr.rel (%p452) target = $region16
        $region15: #{tpu_custom_call.1} parent=11 // pred_region
          %s456 = ssub.s32 128, 128
          %457 = vsyncadd [#allocation6], %s456
          %s458 = smul.addr %s45, 128
          %s459 = scalar_lea.hbm %s1, %s458
          %s461 = sshll.u32 [#allocation5], 4
          %s462 = int_to_ptr.vmem [resolvable:$true] %s461
          %464 = dma.hbm_to_vmem [thread:$0]  %s459, 128, %s462, [#allocation6]
        $region16: #{tpu_custom_call.1} parent=11 // pred_fallthru
          _
        // Predicated region
        $region17: #{tpu_custom_call.1} parent=11 // pred_check
          %p465 = pneg %p122
        $region18: #{tpu_custom_call.1} parent=11 // pred_check_branch
          %467 = sbr.rel (%p465) target = $region20
        $region19: #{tpu_custom_call.1} parent=11 // pred_region
          %s469 = ssub.s32 512, 512
          %470 = vsyncadd [#allocation6], %s469
          %s471 = sshll.u32 [#allocation7], 4
          %s472 = int_to_ptr.vmem [resolvable:$true] %s471
          %477 = dma.hbm_to_vmem [thread:$0]  %s2, 512, %s472, [#allocation6], 128, 128, 8
        $region20: #{tpu_custom_call.1} parent=11 // pred_fallthru
          _
        // Predicated region
        $region21: #{tpu_custom_call.1} parent=11 // pred_check
          %p478 = pneg %p143
        $region22: #{tpu_custom_call.1} parent=11 // pred_check_branch
          %480 = sbr.rel (%p478) target = $region24
        $region23: #{tpu_custom_call.1} parent=11 // pred_region
          _
        $region24: #{tpu_custom_call.1} parent=11 // pred_fallthru
          _
        // Predicated region
        $region25: #{tpu_custom_call.1} parent=11 // pred_check
          %p481 = pneg %p164
        $region26: #{tpu_custom_call.1} parent=11 // pred_check_branch
          %483 = sbr.rel (%p481) target = $region28
        $region27: #{tpu_custom_call.1} parent=11 // pred_region
          %s485 = ssub.s32 512, 512
          %486 = vsyncadd [#allocation9], %s485
          %s487 = sshll.u32 [#allocation8], 4
          %s488 = int_to_ptr.vmem [resolvable:$true] %s487
          %493 = dma.hbm_to_vmem [thread:$0]  %s4, 512, %s488, [#allocation9], 128, 128, 8
        $region28: #{tpu_custom_call.1} parent=11 // pred_fallthru
          _
        // Predicated region
        $region29: #{tpu_custom_call.1} parent=11 // pred_check
          %p494 = pneg %p185
        $region30: #{tpu_custom_call.1} parent=11 // pred_check_branch
          %496 = sbr.rel (%p494) target = $region32
        $region31: #{tpu_custom_call.1} parent=11 // pred_region
          _
        $region32: #{tpu_custom_call.1} parent=11 // pred_fallthru
          _
        // Predicated region
        $region33: #{tpu_custom_call.1} parent=11 // pred_check
          %p497 = pneg %p206
        $region34: #{tpu_custom_call.1} parent=11 // pred_check_branch
          %499 = sbr.rel (%p497) target = $region36
        $region35: #{tpu_custom_call.1} parent=11 // pred_region
          %s501 = ssub.s32 512, 512
          %502 = vsyncadd [#allocation9], %s501
          %s503 = sshll.u32 [#allocation10], 4
          %s504 = int_to_ptr.vmem [resolvable:$true] %s503
          %509 = dma.hbm_to_vmem [thread:$0]  %s6, 512, %s504, [#allocation9], 128, 128, 8
        $region36: #{tpu_custom_call.1} parent=11 // pred_fallthru
          _
        // Predicated region
        $region37: #{tpu_custom_call.1} parent=11 // pred_check
          %p510 = pneg %p227
        $region38: #{tpu_custom_call.1} parent=11 // pred_check_branch
          %512 = sbr.rel (%p510) target = $region40
        $region39: #{tpu_custom_call.1} parent=11 // pred_region
          _
        $region40: #{tpu_custom_call.1} parent=11 // pred_fallthru
          _
        // Predicated region
        $region41: #{tpu_custom_call.1} parent=11 // pred_check
          %p513 = pneg %p248
        $region42: #{tpu_custom_call.1} parent=11 // pred_check_branch
          %515 = sbr.rel (%p513) target = $region44
        $region43: #{tpu_custom_call.1} parent=11 // pred_region
          %s517 = ssub.s32 512, 512
          %518 = vsyncadd [#allocation12], %s517
          %s519 = sshll.u32 [#allocation11], 4
          %s520 = int_to_ptr.vmem [resolvable:$true] %s519
          %525 = dma.hbm_to_vmem [thread:$0]  %s8, 512, %s520, [#allocation12], 128, 128, 8
        $region44: #{tpu_custom_call.1} parent=11 // pred_fallthru
          _
        // Predicated region
        $region45: #{tpu_custom_call.1} parent=11 // pred_check
          %p526 = pneg %p269
        $region46: #{tpu_custom_call.1} parent=11 // pred_check_branch
          %528 = sbr.rel (%p526) target = $region48
        $region47: #{tpu_custom_call.1} parent=11 // pred_region
          _
        $region48: #{tpu_custom_call.1} parent=11 // pred_fallthru
          _
        // Predicated region
        $region49: #{tpu_custom_call.1} parent=11 // pred_check
          %p529 = pneg %p290
        $region50: #{tpu_custom_call.1} parent=11 // pred_check_branch
          %531 = sbr.rel (%p529) target = $region52
        $region51: #{tpu_custom_call.1} parent=11 // pred_region
          _
        $region52: #{tpu_custom_call.1} parent=11 // pred_fallthru
          _
        // Predicated region
        $region53: #{tpu_custom_call.1} parent=11 // pred_check
          %p532 = pneg %p311
        $region54: #{tpu_custom_call.1} parent=11 // pred_check_branch
          %534 = sbr.rel (%p532) target = $region56
        $region55: #{tpu_custom_call.1} parent=11 // pred_region
          _
        $region56: #{tpu_custom_call.1} parent=11 // pred_fallthru
          _
        // Predicated region
        $region57: #{tpu_custom_call.1} parent=11 // pred_check
          %p535 = pneg %p332
        $region58: #{tpu_custom_call.1} parent=11 // pred_check_branch
          %537 = sbr.rel (%p535) target = $region60
        $region59: #{tpu_custom_call.1} parent=11 // pred_region
          %s539 = ssub.s32 512, 512
          %540 = vsyncadd [#allocation12], %s539
          %s541 = sshll.u32 [#allocation13], 4
          %s542 = int_to_ptr.vmem [resolvable:$true] %s541
          %547 = dma.hbm_to_vmem [thread:$0]  %s12, 512, %s542, [#allocation12], 128, 128, 8
        $region60: #{tpu_custom_call.1} parent=11 // pred_fallthru
          _
        // Predicated region
        $region61: #{tpu_custom_call.1} parent=11 // pred_check
          %p548 = pneg %p353
        $region62: #{tpu_custom_call.1} parent=11 // pred_check_branch
          %550 = sbr.rel (%p548) target = $region64
        $region63: #{tpu_custom_call.1} parent=11 // pred_region
          _
        $region64: #{tpu_custom_call.1} parent=11 // pred_fallthru
          _
      $region12: #{tpu_custom_call.1} parent=5 // pred_fallthru
        _
      %p551 = scmp.lt.s32.totalorder %s35, 2
      // Predicated region
      $region65: #{tpu_custom_call.1} parent=5 // pred_check
        %p552 = pneg %p551
      $region66: #{tpu_custom_call.1} parent=5 // pred_check_branch
        %554 = sbr.rel (%p552) target = $region68
      $region67: #{tpu_custom_call.1} parent=5 // pred_region
        // Predicated region
        $region69: #{tpu_custom_call.1} parent=67 // pred_check
          %p555 = pneg %p69
        $region70: #{tpu_custom_call.1} parent=67 // pred_check_branch
          %557 = sbr.rel (%p555) target = $region72
        $region71: #{tpu_custom_call.1} parent=67 // pred_region
          %s558 = sand.u32 %s59, 1
          %s559 = scalar_lea.sflag [#allocation3], %s558
          %s560 = sand.u32 %s59, 1
          %s561 = smul.addr %s560, 8
          %s562 = scalar_lea.vmem [#allocation2], %s561
          %s564 = ssub.s32 128, 128
          %565 = vsyncadd %s559, %s564
          %s566 = sadd.s32 %s43, %s42
          %s567 = smul.addr %s566, 128
          %s568 = scalar_lea.hbm %s0, %s567
          %s570 = sshll.u32 %s562, 4
          %s571 = int_to_ptr.vmem [resolvable:$true] %s570
          %573 = dma.hbm_to_vmem [thread:$0]  %s568, 128, %s571, %s559
        $region72: #{tpu_custom_call.1} parent=67 // pred_fallthru
          _
      $region68: #{tpu_custom_call.1} parent=5 // pred_fallthru
        _
      %p574 = scmp.le.s32.totalorder 1, %s35
      %p575 = scmp.lt.s32.totalorder %s35, 3
      %p576 = pnand %p574, %p575
      %p577 = pneg %p576
      // Predicated region
      $region73: #{tpu_custom_call.1} parent=5 // pred_check
        _
      $region74: #{tpu_custom_call.1} parent=5 // pred_check_branch
        %579 = sbr.rel (%p576) target = $region76
      $region75: #{tpu_custom_call.1} parent=5 // pred_region
        %s580 = ssub.s32 %s35, 1
        %s581 = sand.u32 %s62, 1
        %s582 = scalar_lea.sflag [#allocation3], %s581
        %s583 = sand.u32 %s62, 1
        %s584 = smul.addr %s583, 8
        %s585 = scalar_lea.vmem [#allocation2], %s584
        // Predicated region
        $region77: #{tpu_custom_call.1} parent=75 // pred_check
          %p586 = pneg %p75
        $region78: #{tpu_custom_call.1} parent=75 // pred_check_branch
          %588 = sbr.rel (%p586) target = $region80
        $region79: #{tpu_custom_call.1} parent=75 // pred_region
          %589 = dma.done %s582, 128
        $region80: #{tpu_custom_call.1} parent=75 // pred_fallthru
          _
        // Predicated region
        $region81: #{tpu_custom_call.1} parent=75 // pred_check
          %p590 = pneg %p101
        $region82: #{tpu_custom_call.1} parent=75 // pred_check_branch
          %592 = sbr.rel (%p590) target = $region84
        $region83: #{tpu_custom_call.1} parent=75 // pred_region
          %593 = dma.done [#allocation6], 128
        $region84: #{tpu_custom_call.1} parent=75 // pred_fallthru
          _
        // Predicated region
        $region85: #{tpu_custom_call.1} parent=75 // pred_check
          %p594 = pneg %p122
        $region86: #{tpu_custom_call.1} parent=75 // pred_check_branch
          %596 = sbr.rel (%p594) target = $region88
        $region87: #{tpu_custom_call.1} parent=75 // pred_region
          %597 = dma.done [#allocation6], 512
        $region88: #{tpu_custom_call.1} parent=75 // pred_fallthru
          _
        // Predicated region
        $region89: #{tpu_custom_call.1} parent=75 // pred_check
          %p598 = pneg %p164
        $region90: #{tpu_custom_call.1} parent=75 // pred_check_branch
          %600 = sbr.rel (%p598) target = $region92
        $region91: #{tpu_custom_call.1} parent=75 // pred_region
          %601 = dma.done [#allocation9], 512
        $region92: #{tpu_custom_call.1} parent=75 // pred_fallthru
          _
        // Predicated region
        $region93: #{tpu_custom_call.1} parent=75 // pred_check
          %p602 = pneg %p206
        $region94: #{tpu_custom_call.1} parent=75 // pred_check_branch
          %604 = sbr.rel (%p602) target = $region96
        $region95: #{tpu_custom_call.1} parent=75 // pred_region
          %605 = dma.done [#allocation9], 512
        $region96: #{tpu_custom_call.1} parent=75 // pred_fallthru
          _
        // Predicated region
        $region97: #{tpu_custom_call.1} parent=75 // pred_check
          %p606 = pneg %p248
        $region98: #{tpu_custom_call.1} parent=75 // pred_check_branch
          %608 = sbr.rel (%p606) target = $region100
        $region99: #{tpu_custom_call.1} parent=75 // pred_region
          %609 = dma.done [#allocation12], 512
        $region100: #{tpu_custom_call.1} parent=75 // pred_fallthru
          _
        // Predicated region
        $region101: #{tpu_custom_call.1} parent=75 // pred_check
          %p610 = pneg %p332
        $region102: #{tpu_custom_call.1} parent=75 // pred_check_branch
          %612 = sbr.rel (%p610) target = $region104
        $region103: #{tpu_custom_call.1} parent=75 // pred_region
          %613 = dma.done [#allocation12], 512
        $region104: #{tpu_custom_call.1} parent=75 // pred_fallthru
          _
        %s614 = sand.u32 %s62, 1
        %s615 = scalar_lea.sflag [#allocation3], %s614
        %s616 = sand.u32 %s62, 1
        %s617 = smul.addr %s616, 8
        %s618 = scalar_lea.vmem [#allocation2], %s617
        %p619 = pneg %p75
        %p620 = pneg %p72
        %p621 = pneg %p101
        %p622 = pneg %p98
        %p623 = pneg %p122
        %p624 = pneg %p119
        %p625 = pneg %p143
        %p626 = pneg %p140
        %p627 = pneg %p164
        %p628 = pneg %p161
        %p629 = pneg %p185
        %p630 = pneg %p182
        %p631 = pneg %p206
        %p632 = pneg %p203
        %p633 = pneg %p227
        %p634 = pneg %p224
        %p635 = pneg %p248
        %p636 = pneg %p245
        %p637 = pneg %p269
        %p638 = pneg %p266
        %p639 = pneg %p290
        %p640 = pneg %p287
        %p641 = pneg %p311
        %p642 = pneg %p308
        %p643 = pneg %p332
        %p644 = pneg %p329
        %p645 = pneg %p353
        %p646 = pneg %p350
        %p647 = pneg %p381
        %p648 = pneg %p378
        %s649 = sand.u32 %s368, 1
        %s650 = scalar_lea.sflag [#allocation4], %s649
        %s651 = sand.u32 %s368, 1
        %s652 = smul.addr %s651, 8
        %s653 = scalar_lea.vmem [#allocation14], %s652
        %p654 = pneg %p409
        %p655 = pneg %p406
        %s656 = sand.u32 %s40, 1
        %s657 = scalar_lea.sflag [#allocation16], %s656
        %s658 = sand.u32 %s396, 1
        %s659 = smul.addr %s658, 8
        %s660 = scalar_lea.vmem [#allocation15], %s659
        %p661 = pneg %p437
        %p662 = pneg %p434
        %s663 = sand.u32 %s40, 1
        %s664 = scalar_lea.sflag [#allocation16], %s663
        %s665 = sand.u32 %s424, 1
        %s666 = smul.addr %s665, 8
        %s667 = scalar_lea.vmem [#allocation17], %s666
        %v668 = vld [vmem:[%s585] sm:$0xff]
        %v669 = vld [vmem:[#allocation5] sm:$0xff]
        %v670 = vadd.f32 %v668, %v669
        %v671 = vld [vmem:[#allocation7] sm:$0xff]
        %v672 = vld [vmem:[#allocation7 + $0x8] sm:$0xff]
        %v673 = vld [vmem:[#allocation7 + $0x10] sm:$0xff]
        %v674 = vld [vmem:[#allocation7 + $0x18] sm:$0xff]
        %v675 = vld [vmem:[%s3] sm:$0x1]
        %v677 = vlaneseq
        %v678 = vshrl.u32 %v677, 7
        %v679 = vsub.s32 0, %v678
        %v680 = vrot.slane %v675, %v679
        %vm682 = vcmask 261120
        %v684 = vsel %vm682, %v670, 0
        %686 = vmatprep.subr.mxu0 0.0
        %687 = vmatpush1.msra.mxu0 %v671
        %688 = vmatprep.subr.mxu0 0.0
        %689 = vmatpush1.msra.mxu0 %v672
        %690 = vmatprep.subr.mxu0 0.0
        %691 = vmatpush1.msra.mxu0 %v673
        %692 = vmatprep.subr.mxu0 0.0
        %693 = vmatpush1.msra.mxu0 %v674
        %694 = vmatprep.subr.mxu0 0.0
        %695 = vmatpush1.msra.mxu0 0.0
        %696 = vmatprep.subr.mxu0 0.0
        %697 = vmatpush1.msra.mxu0 0.0
        %698 = vmatprep.subr.mxu0 0.0
        %699 = vmatpush1.msra.mxu0 0.0
        %700 = vmatprep.subr.mxu0 0.0
        %701 = vmatpush1.msra.mxu0 0.0
        %702 = vmatprep.subr.mxu0 0.0
        %703 = vmatpush1.msra.mxu0 0.0
        %704 = vmatprep.subr.mxu0 0.0
        %705 = vmatpush1.msra.mxu0 0.0
        %706 = vmatprep.subr.mxu0 0.0
        %707 = vmatpush1.msra.mxu0 0.0
        %708 = vmatprep.subr.mxu0 0.0
        %709 = vmatpush1.msra.mxu0 0.0
        %710 = vmatprep.subr.mxu0 0.0
        %711 = vmatpush1.msra.mxu0 0.0
        %712 = vmatprep.subr.mxu0 0.0
        %713 = vmatpush1.msra.mxu0 0.0
        %714 = vmatprep.subr.mxu0 0.0
        %715 = vmatpush1.msra.mxu0 0.0
        %716 = vmatprep.subr.mxu0 0.0
        %717 = vmatpush1.msra.mxu0 0.0
        %718 = vmatprep.subr.mxu0 0.0
        %719 = vmatpush1.msra.mxu0 0.0
        %720 = vmatprep.subr.mxu0 0.0
        %721 = vmatpush1.msra.mxu0 0.0
        %722 = vmatprep.subr.mxu0 0.0
        %723 = vmatpush1.msra.mxu0 0.0
        %724 = vmatprep.subr.mxu0 0.0
        %725 = vmatpush1.msra.mxu0 0.0
        %726 = vmatprep.subr.mxu0 0.0
        %727 = vmatpush1.msra.mxu0 0.0
        %728 = vmatprep.subr.mxu0 0.0
        %729 = vmatpush1.msra.mxu0 0.0
        %730 = vmatprep.subr.mxu0 0.0
        %731 = vmatpush1.msra.mxu0 0.0
        %732 = vmatprep.subr.mxu0 0.0
        %733 = vmatpush1.msra.mxu0 0.0
        %734 = vmatprep.subr.mxu0 0.0
        %735 = vmatpush1.msra.mxu0 0.0
        %736 = vmatprep.subr.mxu0 0.0
        %737 = vmatpush1.msra.mxu0 0.0
        %738 = vmatprep.subr.mxu0 0.0
        %739 = vmatpush1.msra.mxu0 0.0
        %740 = vmatprep.subr.mxu0 0.0
        %741 = vmatpush1.msra.mxu0 0.0
        %742 = vmatprep.subr.mxu0 0.0
        %743 = vmatpush1.msra.mxu0 0.0
        %744 = vmatprep.subr.mxu0 0.0
        %745 = vmatpush1.msra.mxu0 0.0
        %746 = vmatprep.subr.mxu0 0.0
        %747 = vmatpush1.msra.mxu0 0.0
        %748 = vmatprep.subr.mxu0 0.0
        %749 = vmatpush1.msra.mxu0 0.0
        %750 = vmatprep.mubr.f32.mxu0 0.0
        %751 = vmatmul.mubr.f32.gmra.mrb[0].mxu0 %v684
        %v752 = vpop.f32.mrb[0].mxu0
        %v753 = vadd.f32 %v680, %v752
        %v754 = vpop.f32.mrb[0].mxu0
        %755 = vdwg.mxu0
        %v756 = vld [vmem:[#allocation11] sm:$0xff]
        %v757 = vld [vmem:[#allocation11 + $0x8] sm:$0xff]
        %v758 = vld [vmem:[#allocation11 + $0x10] sm:$0xff]
        %v759 = vld [vmem:[#allocation11 + $0x18] sm:$0xff]
        %v760 = vld [vmem:[%s9] sm:$0x1]
        %v762 = vlaneseq
        %v763 = vshrl.u32 %v762, 7
        %v764 = vsub.s32 0, %v763
        %v765 = vrot.slane %v760, %v764
        %v768 = vsel %vm682, %v753, 0
        %770 = vmatprep.subr.mxu0 0.0
        %771 = vmatpush1.msra.mxu0 %v756
        %772 = vmatprep.subr.mxu0 0.0
        %773 = vmatpush1.msra.mxu0 %v757
        %774 = vmatprep.subr.mxu0 0.0
        %775 = vmatpush1.msra.mxu0 %v758
        %776 = vmatprep.subr.mxu0 0.0
        %777 = vmatpush1.msra.mxu0 %v759
        %778 = vmatprep.subr.mxu0 0.0
        %779 = vmatpush1.msra.mxu0 0.0
        %780 = vmatprep.subr.mxu0 0.0
        %781 = vmatpush1.msra.mxu0 0.0
        %782 = vmatprep.subr.mxu0 0.0
        %783 = vmatpush1.msra.mxu0 0.0
        %784 = vmatprep.subr.mxu0 0.0
        %785 = vmatpush1.msra.mxu0 0.0
        %786 = vmatprep.subr.mxu0 0.0
        %787 = vmatpush1.msra.mxu0 0.0
        %788 = vmatprep.subr.mxu0 0.0
        %789 = vmatpush1.msra.mxu0 0.0
        %790 = vmatprep.subr.mxu0 0.0
        %791 = vmatpush1.msra.mxu0 0.0
        %792 = vmatprep.subr.mxu0 0.0
        %793 = vmatpush1.msra.mxu0 0.0
        %794 = vmatprep.subr.mxu0 0.0
        %795 = vmatpush1.msra.mxu0 0.0
        %796 = vmatprep.subr.mxu0 0.0
        %797 = vmatpush1.msra.mxu0 0.0
        %798 = vmatprep.subr.mxu0 0.0
        %799 = vmatpush1.msra.mxu0 0.0
        %800 = vmatprep.subr.mxu0 0.0
        %801 = vmatpush1.msra.mxu0 0.0
        %802 = vmatprep.subr.mxu0 0.0
        %803 = vmatpush1.msra.mxu0 0.0
        %804 = vmatprep.subr.mxu0 0.0
        %805 = vmatpush1.msra.mxu0 0.0
        %806 = vmatprep.subr.mxu0 0.0
        %807 = vmatpush1.msra.mxu0 0.0
        %808 = vmatprep.subr.mxu0 0.0
        %809 = vmatpush1.msra.mxu0 0.0
        %810 = vmatprep.subr.mxu0 0.0
        %811 = vmatpush1.msra.mxu0 0.0
        %812 = vmatprep.subr.mxu0 0.0
        %813 = vmatpush1.msra.mxu0 0.0
        %814 = vmatprep.subr.mxu0 0.0
        %815 = vmatpush1.msra.mxu0 0.0
        %816 = vmatprep.subr.mxu0 0.0
        %817 = vmatpush1.msra.mxu0 0.0
        %818 = vmatprep.subr.mxu0 0.0
        %819 = vmatpush1.msra.mxu0 0.0
        %820 = vmatprep.subr.mxu0 0.0
        %821 = vmatpush1.msra.mxu0 0.0
        %822 = vmatprep.subr.mxu0 0.0
        %823 = vmatpush1.msra.mxu0 0.0
        %824 = vmatprep.subr.mxu0 0.0
        %825 = vmatpush1.msra.mxu0 0.0
        %826 = vmatprep.subr.mxu0 0.0
        %827 = vmatpush1.msra.mxu0 0.0
        %828 = vmatprep.subr.mxu0 0.0
        %829 = vmatpush1.msra.mxu0 0.0
        %830 = vmatprep.subr.mxu0 0.0
        %831 = vmatpush1.msra.mxu0 0.0
        %832 = vmatprep.subr.mxu0 0.0
        %833 = vmatpush1.msra.mxu0 0.0
        %834 = vmatprep.mubr.f32.mxu0 0.0
        %835 = vmatmul.mubr.f32.gmra.mrb[0].mxu0 %v768
        %v836 = vpop.f32.mrb[0].mxu0
        %v837 = vadd.f32 %v765, %v836
        %v838 = vpop.f32.mrb[0].mxu0
        %839 = vdwg.mxu0
        %840 = vst.msk [vmem:[%s653] sm:$0xff] %vm682, %v837
        %v841 = vld [vmem:[#allocation8] sm:$0xff]
        %v842 = vld [vmem:[#allocation8 + $0x8] sm:$0xff]
        %v843 = vld [vmem:[#allocation8 + $0x10] sm:$0xff]
        %v844 = vld [vmem:[#allocation8 + $0x18] sm:$0xff]
        %v845 = vld [vmem:[%s5] sm:$0x1]
        %v847 = vlaneseq
        %v848 = vshrl.u32 %v847, 7
        %v849 = vsub.s32 0, %v848
        %v850 = vrot.slane %v845, %v849
        %852 = vmatprep.subr.mxu0 0.0
        %853 = vmatpush1.msra.mxu0 %v841
        %854 = vmatprep.subr.mxu0 0.0
        %855 = vmatpush1.msra.mxu0 %v842
        %856 = vmatprep.subr.mxu0 0.0
        %857 = vmatpush1.msra.mxu0 %v843
        %858 = vmatprep.subr.mxu0 0.0
        %859 = vmatpush1.msra.mxu0 %v844
        %860 = vmatprep.subr.mxu0 0.0
        %861 = vmatpush1.msra.mxu0 0.0
        %862 = vmatprep.subr.mxu0 0.0
        %863 = vmatpush1.msra.mxu0 0.0
        %864 = vmatprep.subr.mxu0 0.0
        %865 = vmatpush1.msra.mxu0 0.0
        %866 = vmatprep.subr.mxu0 0.0
        %867 = vmatpush1.msra.mxu0 0.0
        %868 = vmatprep.subr.mxu0 0.0
        %869 = vmatpush1.msra.mxu0 0.0
        %870 = vmatprep.subr.mxu0 0.0
        %871 = vmatpush1.msra.mxu0 0.0
        %872 = vmatprep.subr.mxu0 0.0
        %873 = vmatpush1.msra.mxu0 0.0
        %874 = vmatprep.subr.mxu0 0.0
        %875 = vmatpush1.msra.mxu0 0.0
        %876 = vmatprep.subr.mxu0 0.0
        %877 = vmatpush1.msra.mxu0 0.0
        %878 = vmatprep.subr.mxu0 0.0
        %879 = vmatpush1.msra.mxu0 0.0
        %880 = vmatprep.subr.mxu0 0.0
        %881 = vmatpush1.msra.mxu0 0.0
        %882 = vmatprep.subr.mxu0 0.0
        %883 = vmatpush1.msra.mxu0 0.0
        %884 = vmatprep.subr.mxu0 0.0
        %885 = vmatpush1.msra.mxu0 0.0
        %886 = vmatprep.subr.mxu0 0.0
        %887 = vmatpush1.msra.mxu0 0.0
        %888 = vmatprep.subr.mxu0 0.0
        %889 = vmatpush1.msra.mxu0 0.0
        %890 = vmatprep.subr.mxu0 0.0
        %891 = vmatpush1.msra.mxu0 0.0
        %892 = vmatprep.subr.mxu0 0.0
        %893 = vmatpush1.msra.mxu0 0.0
        %894 = vmatprep.subr.mxu0 0.0
        %895 = vmatpush1.msra.mxu0 0.0
        %896 = vmatprep.subr.mxu0 0.0
        %897 = vmatpush1.msra.mxu0 0.0
        %898 = vmatprep.subr.mxu0 0.0
        %899 = vmatpush1.msra.mxu0 0.0
        %900 = vmatprep.subr.mxu0 0.0
        %901 = vmatpush1.msra.mxu0 0.0
        %902 = vmatprep.subr.mxu0 0.0
        %903 = vmatpush1.msra.mxu0 0.0
        %904 = vmatprep.subr.mxu0 0.0
        %905 = vmatpush1.msra.mxu0 0.0
        %906 = vmatprep.subr.mxu0 0.0
        %907 = vmatpush1.msra.mxu0 0.0
        %908 = vmatprep.subr.mxu0 0.0
        %909 = vmatpush1.msra.mxu0 0.0
        %910 = vmatprep.subr.mxu0 0.0
        %911 = vmatpush1.msra.mxu0 0.0
        %912 = vmatprep.subr.mxu0 0.0
        %913 = vmatpush1.msra.mxu0 0.0
        %914 = vmatprep.subr.mxu0 0.0
        %915 = vmatpush1.msra.mxu0 0.0
        %916 = vmatprep.mubr.f32.mxu0 0.0
        %917 = vmatmul.mubr.f32.gmra.mrb[0].mxu0 %v684
        %v918 = vpop.f32.mrb[0].mxu0
        %v919 = vadd.f32 %v850, %v918
        %v920 = vpop.f32.mrb[0].mxu0
        %921 = vdwg.mxu0
        %v922 = vld [vmem:[%s10] sm:$0xff]
        %v923 = vld [vmem:[%s10 + $0x8] sm:$0xff]
        %v924 = vld [vmem:[%s10 + $0x10] sm:$0xff]
        %v925 = vld [vmem:[%s10 + $0x18] sm:$0xff]
        %v926 = vld [vmem:[%s11] sm:$0x1]
        %v928 = vlaneseq
        %v929 = vshrl.u32 %v928, 7
        %v930 = vsub.s32 0, %v929
        %v931 = vrot.slane %v926, %v930
        %v934 = vsel %vm682, %v919, 0
        %936 = vmatprep.subr.mxu0 0.0
        %937 = vmatpush1.msra.mxu0 %v922
        %938 = vmatprep.subr.mxu0 0.0
        %939 = vmatpush1.msra.mxu0 %v923
        %940 = vmatprep.subr.mxu0 0.0
        %941 = vmatpush1.msra.mxu0 %v924
        %942 = vmatprep.subr.mxu0 0.0
        %943 = vmatpush1.msra.mxu0 %v925
        %944 = vmatprep.subr.mxu0 0.0
        %945 = vmatpush1.msra.mxu0 0.0
        %946 = vmatprep.subr.mxu0 0.0
        %947 = vmatpush1.msra.mxu0 0.0
        %948 = vmatprep.subr.mxu0 0.0
        %949 = vmatpush1.msra.mxu0 0.0
        %950 = vmatprep.subr.mxu0 0.0
        %951 = vmatpush1.msra.mxu0 0.0
        %952 = vmatprep.subr.mxu0 0.0
        %953 = vmatpush1.msra.mxu0 0.0
        %954 = vmatprep.subr.mxu0 0.0
        %955 = vmatpush1.msra.mxu0 0.0
        %956 = vmatprep.subr.mxu0 0.0
        %957 = vmatpush1.msra.mxu0 0.0
        %958 = vmatprep.subr.mxu0 0.0
        %959 = vmatpush1.msra.mxu0 0.0
        %960 = vmatprep.subr.mxu0 0.0
        %961 = vmatpush1.msra.mxu0 0.0
        %962 = vmatprep.subr.mxu0 0.0
        %963 = vmatpush1.msra.mxu0 0.0
        %964 = vmatprep.subr.mxu0 0.0
        %965 = vmatpush1.msra.mxu0 0.0
        %966 = vmatprep.subr.mxu0 0.0
        %967 = vmatpush1.msra.mxu0 0.0
        %968 = vmatprep.subr.mxu0 0.0
        %969 = vmatpush1.msra.mxu0 0.0
        %970 = vmatprep.subr.mxu0 0.0
        %971 = vmatpush1.msra.mxu0 0.0
        %972 = vmatprep.subr.mxu0 0.0
        %973 = vmatpush1.msra.mxu0 0.0
        %974 = vmatprep.subr.mxu0 0.0
        %975 = vmatpush1.msra.mxu0 0.0
        %976 = vmatprep.subr.mxu0 0.0
        %977 = vmatpush1.msra.mxu0 0.0
        %978 = vmatprep.subr.mxu0 0.0
        %979 = vmatpush1.msra.mxu0 0.0
        %980 = vmatprep.subr.mxu0 0.0
        %981 = vmatpush1.msra.mxu0 0.0
        %982 = vmatprep.subr.mxu0 0.0
        %983 = vmatpush1.msra.mxu0 0.0
        %984 = vmatprep.subr.mxu0 0.0
        %985 = vmatpush1.msra.mxu0 0.0
        %986 = vmatprep.subr.mxu0 0.0
        %987 = vmatpush1.msra.mxu0 0.0
        %988 = vmatprep.subr.mxu0 0.0
        %989 = vmatpush1.msra.mxu0 0.0
        %990 = vmatprep.subr.mxu0 0.0
        %991 = vmatpush1.msra.mxu0 0.0
        %992 = vmatprep.subr.mxu0 0.0
        %993 = vmatpush1.msra.mxu0 0.0
        %994 = vmatprep.subr.mxu0 0.0
        %995 = vmatpush1.msra.mxu0 0.0
        %996 = vmatprep.subr.mxu0 0.0
        %997 = vmatpush1.msra.mxu0 0.0
        %998 = vmatprep.subr.mxu0 0.0
        %999 = vmatpush1.msra.mxu0 0.0
        %1000 = vmatprep.mubr.f32.mxu0 0.0
        %1001 = vmatmul.mubr.f32.gmra.mrb[0].mxu0 %v934
        %v1002 = vpop.f32.mrb[0].mxu0
        %v1003 = vadd.f32 %v931, %v1002
        %v1004 = vpop.f32.mrb[0].mxu0
        %1005 = vdwg.mxu0
        %1006 = vst.msk [vmem:[%s660] sm:$0xff] %vm682, %v1003
        %v1007 = vld [vmem:[#allocation10] sm:$0xff]
        %v1008 = vld [vmem:[#allocation10 + $0x8] sm:$0xff]
        %v1009 = vld [vmem:[#allocation10 + $0x10] sm:$0xff]
        %v1010 = vld [vmem:[#allocation10 + $0x18] sm:$0xff]
        %v1011 = vld [vmem:[%s7] sm:$0x1]
        %v1013 = vlaneseq
        %v1014 = vshrl.u32 %v1013, 7
        %v1015 = vsub.s32 0, %v1014
        %v1016 = vrot.slane %v1011, %v1015
        %1018 = vmatprep.subr.mxu0 0.0
        %1019 = vmatpush1.msra.mxu0 %v1007
        %1020 = vmatprep.subr.mxu0 0.0
        %1021 = vmatpush1.msra.mxu0 %v1008
        %1022 = vmatprep.subr.mxu0 0.0
        %1023 = vmatpush1.msra.mxu0 %v1009
        %1024 = vmatprep.subr.mxu0 0.0
        %1025 = vmatpush1.msra.mxu0 %v1010
        %1026 = vmatprep.subr.mxu0 0.0
        %1027 = vmatpush1.msra.mxu0 0.0
        %1028 = vmatprep.subr.mxu0 0.0
        %1029 = vmatpush1.msra.mxu0 0.0
        %1030 = vmatprep.subr.mxu0 0.0
        %1031 = vmatpush1.msra.mxu0 0.0
        %1032 = vmatprep.subr.mxu0 0.0
        %1033 = vmatpush1.msra.mxu0 0.0
        %1034 = vmatprep.subr.mxu0 0.0
        %1035 = vmatpush1.msra.mxu0 0.0
        %1036 = vmatprep.subr.mxu0 0.0
        %1037 = vmatpush1.msra.mxu0 0.0
        %1038 = vmatprep.subr.mxu0 0.0
        %1039 = vmatpush1.msra.mxu0 0.0
        %1040 = vmatprep.subr.mxu0 0.0
        %1041 = vmatpush1.msra.mxu0 0.0
        %1042 = vmatprep.subr.mxu0 0.0
        %1043 = vmatpush1.msra.mxu0 0.0
        %1044 = vmatprep.subr.mxu0 0.0
        %1045 = vmatpush1.msra.mxu0 0.0
        %1046 = vmatprep.subr.mxu0 0.0
        %1047 = vmatpush1.msra.mxu0 0.0
        %1048 = vmatprep.subr.mxu0 0.0
        %1049 = vmatpush1.msra.mxu0 0.0
        %1050 = vmatprep.subr.mxu0 0.0
        %1051 = vmatpush1.msra.mxu0 0.0
        %1052 = vmatprep.subr.mxu0 0.0
        %1053 = vmatpush1.msra.mxu0 0.0
        %1054 = vmatprep.subr.mxu0 0.0
        %1055 = vmatpush1.msra.mxu0 0.0
        %1056 = vmatprep.subr.mxu0 0.0
        %1057 = vmatpush1.msra.mxu0 0.0
        %1058 = vmatprep.subr.mxu0 0.0
        %1059 = vmatpush1.msra.mxu0 0.0
        %1060 = vmatprep.subr.mxu0 0.0
        %1061 = vmatpush1.msra.mxu0 0.0
        %1062 = vmatprep.subr.mxu0 0.0
        %1063 = vmatpush1.msra.mxu0 0.0
        %1064 = vmatprep.subr.mxu0 0.0
        %1065 = vmatpush1.msra.mxu0 0.0
        %1066 = vmatprep.subr.mxu0 0.0
        %1067 = vmatpush1.msra.mxu0 0.0
        %1068 = vmatprep.subr.mxu0 0.0
        %1069 = vmatpush1.msra.mxu0 0.0
        %1070 = vmatprep.subr.mxu0 0.0
        %1071 = vmatpush1.msra.mxu0 0.0
        %1072 = vmatprep.subr.mxu0 0.0
        %1073 = vmatpush1.msra.mxu0 0.0
        %1074 = vmatprep.subr.mxu0 0.0
        %1075 = vmatpush1.msra.mxu0 0.0
        %1076 = vmatprep.subr.mxu0 0.0
        %1077 = vmatpush1.msra.mxu0 0.0
        %1078 = vmatprep.subr.mxu0 0.0
        %1079 = vmatpush1.msra.mxu0 0.0
        %1080 = vmatprep.subr.mxu0 0.0
        %1081 = vmatpush1.msra.mxu0 0.0
        %1082 = vmatprep.mubr.f32.mxu0 0.0
        %1083 = vmatmul.mubr.f32.gmra.mrb[0].mxu0 %v684
        %v1084 = vpop.f32.mrb[0].mxu0
        %v1085 = vadd.f32 %v1016, %v1084
        %v1086 = vpop.f32.mrb[0].mxu0
        %1087 = vdwg.mxu0
        %v1088 = vld [vmem:[#allocation13] sm:$0xff]
        %v1089 = vld [vmem:[#allocation13 + $0x8] sm:$0xff]
        %v1090 = vld [vmem:[#allocation13 + $0x10] sm:$0xff]
        %v1091 = vld [vmem:[#allocation13 + $0x18] sm:$0xff]
        %v1092 = vld [vmem:[%s13] sm:$0x1]
        %v1094 = vlaneseq
        %v1095 = vshrl.u32 %v1094, 7
        %v1096 = vsub.s32 0, %v1095
        %v1097 = vrot.slane %v1092, %v1096
        %v1100 = vsel %vm682, %v1085, 0
        %1102 = vmatprep.subr.mxu0 0.0
        %1103 = vmatpush1.msra.mxu0 %v1088
        %1104 = vmatprep.subr.mxu0 0.0
        %1105 = vmatpush1.msra.mxu0 %v1089
        %1106 = vmatprep.subr.mxu0 0.0
        %1107 = vmatpush1.msra.mxu0 %v1090
        %1108 = vmatprep.subr.mxu0 0.0
        %1109 = vmatpush1.msra.mxu0 %v1091
        %1110 = vmatprep.subr.mxu0 0.0
        %1111 = vmatpush1.msra.mxu0 0.0
        %1112 = vmatprep.subr.mxu0 0.0
        %1113 = vmatpush1.msra.mxu0 0.0
        %1114 = vmatprep.subr.mxu0 0.0
        %1115 = vmatpush1.msra.mxu0 0.0
        %1116 = vmatprep.subr.mxu0 0.0
        %1117 = vmatpush1.msra.mxu0 0.0
        %1118 = vmatprep.subr.mxu0 0.0
        %1119 = vmatpush1.msra.mxu0 0.0
        %1120 = vmatprep.subr.mxu0 0.0
        %1121 = vmatpush1.msra.mxu0 0.0
        %1122 = vmatprep.subr.mxu0 0.0
        %1123 = vmatpush1.msra.mxu0 0.0
        %1124 = vmatprep.subr.mxu0 0.0
        %1125 = vmatpush1.msra.mxu0 0.0
        %1126 = vmatprep.subr.mxu0 0.0
        %1127 = vmatpush1.msra.mxu0 0.0
        %1128 = vmatprep.subr.mxu0 0.0
        %1129 = vmatpush1.msra.mxu0 0.0
        %1130 = vmatprep.subr.mxu0 0.0
        %1131 = vmatpush1.msra.mxu0 0.0
        %1132 = vmatprep.subr.mxu0 0.0
        %1133 = vmatpush1.msra.mxu0 0.0
        %1134 = vmatprep.subr.mxu0 0.0
        %1135 = vmatpush1.msra.mxu0 0.0
        %1136 = vmatprep.subr.mxu0 0.0
        %1137 = vmatpush1.msra.mxu0 0.0
        %1138 = vmatprep.subr.mxu0 0.0
        %1139 = vmatpush1.msra.mxu0 0.0
        %1140 = vmatprep.subr.mxu0 0.0
        %1141 = vmatpush1.msra.mxu0 0.0
        %1142 = vmatprep.subr.mxu0 0.0
        %1143 = vmatpush1.msra.mxu0 0.0
        %1144 = vmatprep.subr.mxu0 0.0
        %1145 = vmatpush1.msra.mxu0 0.0
        %1146 = vmatprep.subr.mxu0 0.0
        %1147 = vmatpush1.msra.mxu0 0.0
        %1148 = vmatprep.subr.mxu0 0.0
        %1149 = vmatpush1.msra.mxu0 0.0
        %1150 = vmatprep.subr.mxu0 0.0
        %1151 = vmatpush1.msra.mxu0 0.0
        %1152 = vmatprep.subr.mxu0 0.0
        %1153 = vmatpush1.msra.mxu0 0.0
        %1154 = vmatprep.subr.mxu0 0.0
        %1155 = vmatpush1.msra.mxu0 0.0
        %1156 = vmatprep.subr.mxu0 0.0
        %1157 = vmatpush1.msra.mxu0 0.0
        %1158 = vmatprep.subr.mxu0 0.0
        %1159 = vmatpush1.msra.mxu0 0.0
        %1160 = vmatprep.subr.mxu0 0.0
        %1161 = vmatpush1.msra.mxu0 0.0
        %1162 = vmatprep.subr.mxu0 0.0
        %1163 = vmatpush1.msra.mxu0 0.0
        %1164 = vmatprep.subr.mxu0 0.0
        %1165 = vmatpush1.msra.mxu0 0.0
        %1166 = vmatprep.mubr.f32.mxu0 0.0
        %1167 = vmatmul.mubr.f32.gmra.mrb[0].mxu0 %v1100
        %v1168 = vpop.f32.mrb[0].mxu0
        %v1169 = vadd.f32 %v1097, %v1168
        %v1170 = vpop.f32.mrb[0].mxu0
        %1171 = vdwg.mxu0
        %1172 = vst.msk [vmem:[%s667] sm:$0xff] %vm682, %v1169
        %s1173 = sand.u32 %s368, 1
        %s1174 = scalar_lea.sflag [#allocation4], %s1173
        %s1175 = sand.u32 %s368, 1
        %s1176 = smul.addr %s1175, 8
        %s1177 = scalar_lea.vmem [#allocation14], %s1176
        %s1178 = sand.u32 %s40, 1
        %s1179 = scalar_lea.sflag [#allocation16], %s1178
        %s1180 = sand.u32 %s396, 1
        %s1181 = smul.addr %s1180, 8
        %s1182 = scalar_lea.vmem [#allocation15], %s1181
        %s1183 = sand.u32 %s40, 1
        %s1184 = scalar_lea.sflag [#allocation16], %s1183
        %s1185 = sand.u32 %s424, 1
        %s1186 = smul.addr %s1185, 8
        %s1187 = scalar_lea.vmem [#allocation17], %s1186
        // Predicated region
        $region105: #{tpu_custom_call.1} parent=75 // pred_check
          %p1188 = pneg %p378
        $region106: #{tpu_custom_call.1} parent=75 // pred_check_branch
          %1190 = sbr.rel (%p1188) target = $region108
        $region107: #{tpu_custom_call.1} parent=75 // pred_region
          %s1192 = ssub.s32 128, 128
          %1193 = vsyncadd %s1174, %s1192
          %s1194 = sadd.s32 %s45, %s44
          %s1195 = smul.addr %s1194, 128
          %s1196 = scalar_lea.hbm %s14, %s1195
          %s1198 = sshll.u32 %s1177, 4
          %s1199 = int_to_ptr.vmem [resolvable:$true] %s1198
          %1201 = dma.vmem_to_hbm [thread:$0]  %s1199, 128, %s1196, %s1174
        $region108: #{tpu_custom_call.1} parent=75 // pred_fallthru
          _
        // Predicated region
        $region109: #{tpu_custom_call.1} parent=75 // pred_check
          %p1202 = pneg %p406
        $region110: #{tpu_custom_call.1} parent=75 // pred_check_branch
          %1204 = sbr.rel (%p1202) target = $region112
        $region111: #{tpu_custom_call.1} parent=75 // pred_region
          %s1206 = ssub.s32 128, 128
          %1207 = vsyncadd %s1179, %s1206
          %s1208 = sadd.s32 %s45, %s44
          %s1209 = smul.addr %s1208, 128
          %s1210 = scalar_lea.hbm %s15, %s1209
          %s1212 = sshll.u32 %s1182, 4
          %s1213 = int_to_ptr.vmem [resolvable:$true] %s1212
          %1215 = dma.vmem_to_hbm [thread:$0]  %s1213, 128, %s1210, %s1179
        $region112: #{tpu_custom_call.1} parent=75 // pred_fallthru
          _
        // Predicated region
        $region113: #{tpu_custom_call.1} parent=75 // pred_check
          %p1216 = pneg %p434
        $region114: #{tpu_custom_call.1} parent=75 // pred_check_branch
          %1218 = sbr.rel (%p1216) target = $region116
        $region115: #{tpu_custom_call.1} parent=75 // pred_region
          %s1220 = ssub.s32 128, 128
          %1221 = vsyncadd %s1184, %s1220
          %s1222 = sadd.s32 %s45, %s44
          %s1223 = smul.addr %s1222, 128
          %s1224 = scalar_lea.hbm %s16, %s1223
          %s1226 = sshll.u32 %s1187, 4
          %s1227 = int_to_ptr.vmem [resolvable:$true] %s1226
          %1229 = dma.vmem_to_hbm [thread:$0]  %s1227, 128, %s1224, %s1184
        $region116: #{tpu_custom_call.1} parent=75 // pred_fallthru
          _
      $region76: #{tpu_custom_call.1} parent=5 // pred_fallthru
        _
      %p1230 = scmp.le.s32.totalorder 2, %s35
      // Predicated region
      $region117: #{tpu_custom_call.1} parent=5 // pred_check
        %p1231 = pneg %p1230
      $region118: #{tpu_custom_call.1} parent=5 // pred_check_branch
        %1233 = sbr.rel (%p1231) target = $region120
      $region119: #{tpu_custom_call.1} parent=5 // pred_region
        %s1234 = ssub.s32 %s35, 2
        // Predicated region
        $region121: #{tpu_custom_call.1} parent=119 // pred_check
          %p1235 = pneg %p384
        $region122: #{tpu_custom_call.1} parent=119 // pred_check_branch
          %1237 = sbr.rel (%p1235) target = $region124
        $region123: #{tpu_custom_call.1} parent=119 // pred_region
          %s1238 = sand.u32 %s369, 1
          %s1239 = scalar_lea.sflag [#allocation4], %s1238
          %s1240 = sand.u32 %s369, 1
          %s1241 = smul.addr %s1240, 8
          %s1242 = scalar_lea.vmem [#allocation14], %s1241
          %1243 = dma.done %s1239, 128
        $region124: #{tpu_custom_call.1} parent=119 // pred_fallthru
          _
        // Predicated region
        $region125: #{tpu_custom_call.1} parent=119 // pred_check
          %p1244 = pneg %p412
        $region126: #{tpu_custom_call.1} parent=119 // pred_check_branch
          %1246 = sbr.rel (%p1244) target = $region128
        $region127: #{tpu_custom_call.1} parent=119 // pred_region
          %s1247 = sand.u32 %s41, 1
          %s1248 = scalar_lea.sflag [#allocation16], %s1247
          %s1249 = sand.u32 %s397, 1
          %s1250 = smul.addr %s1249, 8
          %s1251 = scalar_lea.vmem [#allocation15], %s1250
          %1252 = dma.done %s1248, 128
        $region128: #{tpu_custom_call.1} parent=119 // pred_fallthru
          _
        // Predicated region
        $region129: #{tpu_custom_call.1} parent=119 // pred_check
          %p1253 = pneg %p440
        $region130: #{tpu_custom_call.1} parent=119 // pred_check_branch
          %1255 = sbr.rel (%p1253) target = $region132
        $region131: #{tpu_custom_call.1} parent=119 // pred_region
          %s1256 = sand.u32 %s41, 1
          %s1257 = scalar_lea.sflag [#allocation16], %s1256
          %s1258 = sand.u32 %s425, 1
          %s1259 = smul.addr %s1258, 8
          %s1260 = scalar_lea.vmem [#allocation17], %s1259
          %1261 = dma.done %s1257, 128
        $region132: #{tpu_custom_call.1} parent=119 // pred_fallthru
          _
      $region120: #{tpu_custom_call.1} parent=5 // pred_fallthru
        _
    $region6: #{tpu_custom_call.1} parent=1 // loop_footer
      %s39 = sadd.s32 1, %s35
    $region7: #{tpu_custom_call.1} parent=1 // loop_footer_branch
      %34 = sbr.rel target = $region3
    $region8: #{tpu_custom_call.1} parent=1 // loop_exit
      _
    %1262 = vsyncpa [#allocation3], 1
    %s1263 = scalar_lea.sflag [#allocation3], 1
    %1264 = vsyncpa %s1263, 1
    %1265 = vsyncpa [#allocation6], 1
    %1266 = vsyncpa [#allocation9], 1
    %1267 = vsyncpa [#allocation12], 1
    %1268 = vsyncpa [#allocation4], 1
    %s1269 = scalar_lea.sflag [#allocation4], 1
    %1270 = vsyncpa %s1269, 1
    %1271 = vsyncpa [#allocation16], 1
    %s1272 = scalar_lea.sflag [#allocation16], 1
    %1273 = vsyncpa %s1272, 1

</llo_original>
